<compile_context>
chip_gen: v7x
topology: tpu7x:2x2x1
jax: 0.10.0
libtpu: 0.0.40
codegen_flags: <defaults>
</compile_context>

<pallas_src>
import jax
import jax.numpy as jnp
from jax import lax
from jax.experimental import pallas as pl
from jax.experimental.pallas import tpu as pltpu

HIDDEN = 256
EPS = 1e-12


def ln_linear_kernel(x_ref, w_ref, b_ref, o_ref):
    """One row tile of fused LayerNorm + Linear.

    x_ref: (TM, H)      activation row tile
    w_ref: (H, H_out)   pre-folded, pre-transposed weight (grid-resident)
    b_ref: (1, H_out)   pre-folded bias (f32)
    """
    x = x_ref[...].astype(jnp.float32)

    # LayerNorm statistics over the last dim (biased variance, torch semantics).
    mean = jnp.mean(x, axis=-1, keepdims=True)
    centered = x - mean
    var = jnp.mean(centered * centered, axis=-1, keepdims=True)
    inv = lax.rsqrt(var + EPS)                                # (TM, 1) on the EUP

    # The per-row rsqrt scale commutes through the contraction, so feed the MXU
    # `centered` immediately (scale applied to the (TM, H_out) result instead).
    # Weight is already (K, N): plain contraction, no transposed-RHS layout work.
    out = jnp.dot(centered.astype(w_ref.dtype), w_ref[...],
                  preferred_element_type=jnp.float32)
    out = inv * out + b_ref[...].astype(jnp.float32)
    o_ref[...] = out.astype(o_ref.dtype)


def fold_layernorm_into_linear(gamma, beta, weight, bias, *,
                               param_dtype=jnp.bfloat16):
    """Fold the LayerNorm affine into the Linear. Call ONCE at weight-load time
    (hoisted out of the per-call path), not per forward call.

    Returns:
      w_folded_t: (H_in, H_out) = (W * gamma)^T stored in `param_dtype` so the
                  MXU gets native (bf16) operands; accumulation stays f32.
      b_folded:   (1, H_out) f32 = bias + W @ beta.
    """
    w_f32 = weight.astype(jnp.float32)                       # (H_out, H_in) torch layout
    g = gamma.astype(jnp.float32)
    w_folded_t = (w_f32 * g[None, :]).T.astype(param_dtype)  # (H_in, H_out)
    b_folded = (bias.astype(jnp.float32)
                + w_f32 @ beta.astype(jnp.float32)).reshape(1, -1)
    return w_folded_t, b_folded


def layernorm_linear_folded(x, w_folded_t, b_folded, *, tm=1024,
                            activation_dtype=None):
    """x: (B, S, H); w_folded_t: (H_in, H_out); b_folded: (1, H_out).
    Returns (B, S, H_out) in x.dtype (or `activation_dtype` if given)."""
    B, S, H = x.shape
    H_out = w_folded_t.shape[1]
    M = B * S
    out_dtype = activation_dtype if activation_dtype is not None else x.dtype

    # Single big row tile when M fits: no forced multi-step grid. On 1-TC chips
    # (v5e/v6e) extra steps are pure ~0.35us/step overhead; on v7x this kernel
    # is HBM-bound and splitting mostly duplicates the resident-weight fetch.
    # Large tm amortizes per-step overhead when M is big; keep sublane dim %8.
    tm = max(8, min(((tm + 7) // 8) * 8, ((M + 7) // 8) * 8))
    grid_m = pl.cdiv(M, tm)
    m_pad = grid_m * tm

    x2d = x.reshape(M, H)
    if activation_dtype is not None:
        # bf16-tolerant callers can halve streamed activation bytes here.
        x2d = x2d.astype(activation_dtype)
    if m_pad != M:
        # Only triggers when tm does not divide M. Padded rows are zero ->
        # centered == 0 -> output row == bias; sliced off below.
        x2d = jnp.pad(x2d, ((0, m_pad - M), (0, 0)))

    cost = pl.CostEstimate(
        flops=2 * m_pad * H * H_out,
        transcendentals=m_pad,                                 # rsqrt per row
        bytes_accessed=(x2d.dtype.itemsize * m_pad * H
                        + w_folded_t.dtype.itemsize * H * H_out
                        + jnp.dtype(out_dtype).itemsize * m_pad * H_out
                        + 4 * H_out),
    )

    out2d = pl.pallas_call(
        ln_linear_kernel,
        out_shape=jax.ShapeDtypeStruct((m_pad, H_out), out_dtype),
        grid_spec=pltpu.PrefetchScalarGridSpec(
            num_scalar_prefetch=0,
            grid=(grid_m,),
            in_specs=[
                pl.BlockSpec((tm, H), lambda i: (i, 0)),       # x row tile
                pl.BlockSpec((H, H_out), lambda i: (0, 0)),    # folded W^T (resident)
                pl.BlockSpec((1, H_out), lambda i: (0, 0)),    # folded bias
            ],
            out_specs=pl.BlockSpec((tm, H_out), lambda i: (i, 0)),
        ),
        compiler_params=pltpu.CompilerParams(
            dimension_semantics=("parallel",),
            vmem_limit_bytes=32 * 1024 * 1024,   # safe on v7x's 64 MiB VMEM
        ),
        cost_estimate=cost,
    )(x2d, w_folded_t, b_folded)

    if m_pad != M:
        out2d = out2d[:M]
    return out2d.reshape(B, S, H_out)


def layernorm_linear(x, gamma, beta, weight, bias, **kwargs):
    """One-shot convenience wrapper (prefer folding once and reusing)."""
    w_t, b_f = fold_layernorm_into_linear(gamma, beta, weight, bias)
    return layernorm_linear_folded(x, w_t, b_f, **kwargs)


if __name__ == "__main__":
    key = jax.random.PRNGKey(0)
    kx, kg, kbt, kw, kb = jax.random.split(key, 5)

    # Module shapes: x490 is (1, 384, 256); LayerNorm(256) -> Linear(256, 256).
    B, S, H = 1, 384, HIDDEN
    x = jax.random.normal(kx, (B, S, H), dtype=jnp.float32)

    # Non-trivial affine params to exercise the gamma/beta -> W'/b' folding.
    gamma = 1.0 + 0.1 * jax.random.normal(kg, (H,), dtype=jnp.float32)
    beta = 0.1 * jax.random.normal(kbt, (H,), dtype=jnp.float32)
    bound = 1.0 / (H ** 0.5)
    weight = jax.random.uniform(kw, (H, H), dtype=jnp.float32,
                                minval=-bound, maxval=bound)   # (out, in) torch layout
    bias = jax.random.uniform(kb, (H,), dtype=jnp.float32,
                              minval=-bound, maxval=bound)

    # Reference (torch.nn.LayerNorm + nn.Linear semantics) in plain JAX, f32.
    mean = jnp.mean(x, axis=-1, keepdims=True)
    var = jnp.mean((x - mean) ** 2, axis=-1, keepdims=True)
    xn = (x - mean) / jnp.sqrt(var + EPS)
    ref = (xn * gamma + beta) @ weight.T + bias

    run = jax.jit(layernorm_linear_folded)

    # --- Default perf path: fold+transpose ONCE, bf16 MXU operands, f32 accum ---
    w_bf16, b_fold = fold_layernorm_into_linear(gamma, beta, weight, bias,
                                                param_dtype=jnp.bfloat16)
    out = run(x, w_bf16, b_fold)
    jax.block_until_ready(out)
    assert out.shape == (B, S, H)
    err_bf16 = float(jnp.max(jnp.abs(out - ref)))
    # bf16 operands (K=256, f32 accumulation) -> looser tolerance.
    assert jnp.allclose(out, ref, atol=3e-2, rtol=3e-2), err_bf16

    # --- f32-operand path: tight check of the folded-math semantics ---
    w_f32, b_f32 = fold_layernorm_into_linear(gamma, beta, weight, bias,
                                              param_dtype=jnp.float32)
    out_f32 = run(x, w_f32, b_f32)
    jax.block_until_ready(out_f32)
    err_f32 = float(jnp.max(jnp.abs(out_f32 - ref)))
    assert jnp.allclose(out_f32, ref, atol=2e-3, rtol=2e-3), err_f32

    # TODO(synk): bf16-tolerant callers can additionally pass
    # activation_dtype=jnp.bfloat16 to halve streamed activation bytes.
    print("KERNEL_OK")
</pallas_src>

<mosaic_0001>
module attributes {stable_mosaic.version = 11 : i64} {
  func.func @ln_linear_kernel(%arg0: i32, %arg1: memref<384x256xf32, #tpu.memory_space<vmem>>, %arg2: memref<256x256xbf16, #tpu.memory_space<vmem>>, %arg3: memref<1x256xf32, #tpu.memory_space<vmem>>, %arg4: memref<384x256xf32, #tpu.memory_space<vmem>>) attributes {dimension_semantics = [#tpu.dimension_semantics<parallel>], iteration_bounds = array<i64: 1>, scalar_prefetch = 0 : i64, scratch_operands = 0 : i64, tpu.core_type = #tpu.core_type<tc>, window_params = [{transform_indices = @transform_0, window_bounds = array<i64: 384, 256>}, {pipeline_mode = #tpu.pipeline_mode<synchronous>, transform_indices = @transform_1, window_bounds = array<i64: 256, 256>}, {pipeline_mode = #tpu.pipeline_mode<synchronous>, transform_indices = @transform_2, window_bounds = array<i64: 1, 256>}, {transform_indices = @transform_3, window_bounds = array<i64: 384, 256>}]} {
    %c0 = arith.constant 0 : index
    %c0_0 = arith.constant 0 : index
    %0 = vector.load %arg1[%c0, %c0_0] : memref<384x256xf32, #tpu.memory_space<vmem>>, vector<384x256xf32>
    %cst = arith.constant dense<0.000000e+00> : vector<384xf32>
    %1 = vector.multi_reduction <add>, %0, %cst [1] : vector<384x256xf32> to vector<384xf32>
    %2 = vector.shape_cast %1 : vector<384xf32> to vector<384x1xf32>
    %cst_1 = arith.constant 2.560000e+02 : f32
    %3 = vector.broadcast %cst_1 : f32 to vector<384x1xf32>
    %4 = arith.divf %2, %3 : vector<384x1xf32>
    %5 = vector.broadcast %4 : vector<384x1xf32> to vector<384x256xf32>
    %6 = arith.subf %0, %5 : vector<384x256xf32>
    %7 = arith.mulf %6, %6 : vector<384x256xf32>
    %cst_2 = arith.constant dense<0.000000e+00> : vector<384xf32>
    %8 = vector.multi_reduction <add>, %7, %cst_2 [1] : vector<384x256xf32> to vector<384xf32>
    %9 = vector.shape_cast %8 : vector<384xf32> to vector<384x1xf32>
    %cst_3 = arith.constant 2.560000e+02 : f32
    %10 = vector.broadcast %cst_3 : f32 to vector<384x1xf32>
    %11 = arith.divf %9, %10 : vector<384x1xf32>
    %cst_4 = arith.constant 9.99999996E-13 : f32
    %12 = vector.broadcast %cst_4 : f32 to vector<384x1xf32>
    %13 = arith.addf %11, %12 : vector<384x1xf32>
    %14 = math.rsqrt %13 : vector<384x1xf32>
    %15 = arith.truncf %6 : vector<384x256xf32> to vector<384x256xbf16>
    %c0_5 = arith.constant 0 : index
    %c0_6 = arith.constant 0 : index
    %16 = vector.load %arg2[%c0_5, %c0_6] : memref<256x256xbf16, #tpu.memory_space<vmem>>, vector<256x256xbf16>
    %cst_7 = arith.constant dense<0.000000e+00> : vector<384x256xf32>
    %17 = tpu.matmul %15, %16, %cst_7 {dimension_numbers = #tpu.dot_dimension_numbers<[1], [0], [0], [1], [0, 0, 1, 1], [], []>} : vector<384x256xbf16>, vector<256x256xbf16>, vector<384x256xf32> -> vector<384x256xf32>
    %18 = vector.broadcast %14 : vector<384x1xf32> to vector<384x256xf32>
    %19 = arith.mulf %18, %17 : vector<384x256xf32>
    %c0_8 = arith.constant 0 : index
    %c0_9 = arith.constant 0 : index
    %20 = vector.load %arg3[%c0_8, %c0_9] : memref<1x256xf32, #tpu.memory_space<vmem>>, vector<1x256xf32>
    %21 = vector.broadcast %20 : vector<1x256xf32> to vector<384x256xf32>
    %22 = arith.addf %19, %21 : vector<384x256xf32>
    %c0_10 = arith.constant 0 : index
    %c0_11 = arith.constant 0 : index
    %23 = vector.load %arg4[%c0_10, %c0_11] : memref<384x256xf32, #tpu.memory_space<vmem>>, vector<384x256xf32>
    tpu.vector_store %arg4[%c0_10, %c0_11], %22 {strides = array<i32>} : memref<384x256xf32, #tpu.memory_space<vmem>>, vector<384x256xf32>,
    return
  }
  func.func @transform_0(%arg0: i32) -> (i32, i32) {
    %c0_i32 = arith.constant 0 : i32
    %c0_i32_0 = arith.constant 0 : i32
    return %arg0, %c0_i32 : i32, i32
  }
  func.func @transform_1(%arg0: i32) -> (i32, i32) {
    %c0_i32 = arith.constant 0 : i32
    %c0_i32_0 = arith.constant 0 : i32
    %c0_i32_1 = arith.constant 0 : i32
    return %c0_i32, %c0_i32_0 : i32, i32
  }
  func.func @transform_2(%arg0: i32) -> (i32, i32) {
    %c0_i32 = arith.constant 0 : i32
    %c0_i32_0 = arith.constant 0 : i32
    %c0_i32_1 = arith.constant 0 : i32
    return %c0_i32, %c0_i32_0 : i32, i32
  }
  func.func @transform_3(%arg0: i32) -> (i32, i32) {
    %c0_i32 = arith.constant 0 : i32
    %c0_i32_0 = arith.constant 0 : i32
    return %arg0, %c0_i32 : i32, i32
  }
}

</mosaic_0001>

<llo_original>
// kernel: layernorm_linear_folded.1
$region0: #{layernorm_linear_folded.1}
  #allocation0 [shape = 'u32[]', space=smem, size = 0x4, offset = 0x4, fixed_abs, tag = 'smem constant byte address 0x4 - core index']
  #allocation1 [shape = 'u32[144,128]{1,0:T(1,128)}', space=vmem, size = 0x12000, scoped, tag = 'internal scratch']
  %s0 = inlined_call_operand.hbm [shape: f32[384,256], index: 0, kind: input, shape index: {}]
  %s1 = inlined_call_operand.hbm [shape: bf16[256,256], index: 1, kind: input, shape index: {}]
  %s2 = inlined_call_operand.vmem [shape: f32[1,256], index: 2, kind: input, shape index: {}]
  %s3 = inlined_call_operand.hbm [shape: f32[384,256], index: 3, kind: output, shape index: {}]
  %s4 = sld [smem:[#allocation0]]
  $region30: #{layernorm_linear_folded.1} parent=0
    _
  %s6 = ssub.s32 1, %s4
  %s7 = scalar_select 0, %s6, %s4
  $region1: #{layernorm_linear_folded.1} parent=0
    #allocation2 [shape = 'u8[393216]{0}', space=vmem, size = 0x60000, scoped, tag = 'input window, operand 0, single buffered']
    #allocation3 [shape = 's32[1]{0}', space=sflag, size = 0x4, scoped, tag = 'scoped memory for layernorm_linear_folded.1']
    #allocation4 [shape = 's32[1]{0}', space=sflag, size = 0x4, scoped, tag = 'scoped memory for layernorm_linear_folded.1']
    #allocation5 [shape = 'u8[131072]{0}', space=vmem, size = 0x20000, scoped, tag = 'input window, operand 1, single buffered']
    #allocation6 [shape = 's32[1]{0}', space=sflag, size = 0x4, scoped, tag = 'scoped memory for layernorm_linear_folded.1']
    #allocation7 [shape = 'u8[393216]{0}', space=vmem, size = 0x60000, scoped, tag = 'output window, operand 0, single buffered']
    %8 = vsyncpa [#allocation3], 0
    %9 = vsyncpa [#allocation6], 0
    %10 = vsyncpa [#allocation4], 0
    // Predicated region
    $region2: #{layernorm_linear_folded.1} parent=1 // pred_check
      _
    $region3: #{layernorm_linear_folded.1} parent=1 // pred_check_branch
      %12 = sbr.rel (0) target = $region5
    $region4: #{layernorm_linear_folded.1} parent=1 // pred_region
      %s14 = ssub.s32 12288, 12288
      %15 = vsyncadd [#allocation3], %s14
      %s16 = sshll.u32 [#allocation2], 4
      %s17 = int_to_ptr.vmem [resolvable:$true] %s16
      %22 = dma.hbm_to_vmem [thread:$0]  %s0, 12288, %s17, [#allocation3], 256, 256, 16
    $region5: #{layernorm_linear_folded.1} parent=1 // pred_fallthru
      _
    // Predicated region
    $region6: #{layernorm_linear_folded.1} parent=1 // pred_check
      _
    $region7: #{layernorm_linear_folded.1} parent=1 // pred_check_branch
      %24 = sbr.rel (0) target = $region9
    $region8: #{layernorm_linear_folded.1} parent=1 // pred_region
      %s26 = ssub.s32 4096, 4096
      %27 = vsyncadd [#allocation6], %s26
      %s28 = sshll.u32 [#allocation5], 4
      %s29 = int_to_ptr.vmem [resolvable:$true] %s28
      %34 = dma.hbm_to_vmem [thread:$0]  %s1, 4096, %s29, [#allocation6], 128, 128, 8
    $region9: #{layernorm_linear_folded.1} parent=1 // pred_fallthru
      _
    // Predicated region
    $region10: #{layernorm_linear_folded.1} parent=1 // pred_check
      _
    $region11: #{layernorm_linear_folded.1} parent=1 // pred_check_branch
      %36 = sbr.rel (0) target = $region13
    $region12: #{layernorm_linear_folded.1} parent=1 // pred_region
      _
    $region13: #{layernorm_linear_folded.1} parent=1 // pred_fallthru
      _
    // Predicated region
    $region14: #{layernorm_linear_folded.1} parent=1 // pred_check
      _
    $region15: #{layernorm_linear_folded.1} parent=1 // pred_check_branch
      %38 = sbr.rel (0) target = $region17
    $region16: #{layernorm_linear_folded.1} parent=1 // pred_region
      %39 = dma.done [#allocation3], 12288
    $region17: #{layernorm_linear_folded.1} parent=1 // pred_fallthru
      _
    // Predicated region
    $region18: #{layernorm_linear_folded.1} parent=1 // pred_check
      _
    $region19: #{layernorm_linear_folded.1} parent=1 // pred_check_branch
      %41 = sbr.rel (0) target = $region21
    $region20: #{layernorm_linear_folded.1} parent=1 // pred_region
      %42 = dma.done [#allocation6], 4096
    $region21: #{layernorm_linear_folded.1} parent=1 // pred_fallthru
      _
    %v43 = vld [vmem:[#allocation2] sm:$0xff]
    %v44 = vld [vmem:[#allocation2 + $0x8] sm:$0xff]
    %v45 = vld [vmem:[#allocation2 + $0x10] sm:$0xff]
    %v46 = vld [vmem:[#allocation2 + $0x18] sm:$0xff]
    %v47 = vld [vmem:[#allocation2 + $0x20] sm:$0xff]
    %v48 = vld [vmem:[#allocation2 + $0x28] sm:$0xff]
    %v49 = vld [vmem:[#allocation2 + $0x30] sm:$0xff]
    %v50 = vld [vmem:[#allocation2 + $0x38] sm:$0xff]
    %v51 = vld [vmem:[#allocation2 + $0x40] sm:$0xff]
    %v52 = vld [vmem:[#allocation2 + $0x48] sm:$0xff]
    %v53 = vld [vmem:[#allocation2 + $0x50] sm:$0xff]
    %v54 = vld [vmem:[#allocation2 + $0x58] sm:$0xff]
    %v55 = vld [vmem:[#allocation2 + $0x60] sm:$0xff]
    %v56 = vld [vmem:[#allocation2 + $0x68] sm:$0xff]
    %v57 = vld [vmem:[#allocation2 + $0x70] sm:$0xff]
    %v58 = vld [vmem:[#allocation2 + $0x78] sm:$0xff]
    %v59 = vld [vmem:[#allocation2 + $0x80] sm:$0xff]
    %v60 = vld [vmem:[#allocation2 + $0x88] sm:$0xff]
    %v61 = vld [vmem:[#allocation2 + $0x90] sm:$0xff]
    %v62 = vld [vmem:[#allocation2 + $0x98] sm:$0xff]
    %v63 = vld [vmem:[#allocation2 + $0xa0] sm:$0xff]
    %v64 = vld [vmem:[#allocation2 + $0xa8] sm:$0xff]
    %v65 = vld [vmem:[#allocation2 + $0xb0] sm:$0xff]
    %v66 = vld [vmem:[#allocation2 + $0xb8] sm:$0xff]
    %v67 = vld [vmem:[#allocation2 + $0xc0] sm:$0xff]
    %v68 = vld [vmem:[#allocation2 + $0xc8] sm:$0xff]
    %v69 = vld [vmem:[#allocation2 + $0xd0] sm:$0xff]
    %v70 = vld [vmem:[#allocation2 + $0xd8] sm:$0xff]
    %v71 = vld [vmem:[#allocation2 + $0xe0] sm:$0xff]
    %v72 = vld [vmem:[#allocation2 + $0xe8] sm:$0xff]
    %v73 = vld [vmem:[#allocation2 + $0xf0] sm:$0xff]
    %v74 = vld [vmem:[#allocation2 + $0xf8] sm:$0xff]
    %v75 = vld [vmem:[#allocation2 + $0x100] sm:$0xff]
    %v76 = vld [vmem:[#allocation2 + $0x108] sm:$0xff]
    %v77 = vld [vmem:[#allocation2 + $0x110] sm:$0xff]
    %v78 = vld [vmem:[#allocation2 + $0x118] sm:$0xff]
    %v79 = vld [vmem:[#allocation2 + $0x120] sm:$0xff]
    %v80 = vld [vmem:[#allocation2 + $0x128] sm:$0xff]
    %v81 = vld [vmem:[#allocation2 + $0x130] sm:$0xff]
    %v82 = vld [vmem:[#allocation2 + $0x138] sm:$0xff]
    %v83 = vld [vmem:[#allocation2 + $0x140] sm:$0xff]
    %v84 = vld [vmem:[#allocation2 + $0x148] sm:$0xff]
    %v85 = vld [vmem:[#allocation2 + $0x150] sm:$0xff]
    %v86 = vld [vmem:[#allocation2 + $0x158] sm:$0xff]
    %v87 = vld [vmem:[#allocation2 + $0x160] sm:$0xff]
    %v88 = vld [vmem:[#allocation2 + $0x168] sm:$0xff]
    %v89 = vld [vmem:[#allocation2 + $0x170] sm:$0xff]
    %v90 = vld [vmem:[#allocation2 + $0x178] sm:$0xff]
    %v91 = vld [vmem:[#allocation2 + $0x180] sm:$0xff]
    %v92 = vld [vmem:[#allocation2 + $0x188] sm:$0xff]
    %v93 = vld [vmem:[#allocation2 + $0x190] sm:$0xff]
    %v94 = vld [vmem:[#allocation2 + $0x198] sm:$0xff]
    %v95 = vld [vmem:[#allocation2 + $0x1a0] sm:$0xff]
    %v96 = vld [vmem:[#allocation2 + $0x1a8] sm:$0xff]
    %v97 = vld [vmem:[#allocation2 + $0x1b0] sm:$0xff]
    %v98 = vld [vmem:[#allocation2 + $0x1b8] sm:$0xff]
    %v99 = vld [vmem:[#allocation2 + $0x1c0] sm:$0xff]
    %v100 = vld [vmem:[#allocation2 + $0x1c8] sm:$0xff]
    %v101 = vld [vmem:[#allocation2 + $0x1d0] sm:$0xff]
    %v102 = vld [vmem:[#allocation2 + $0x1d8] sm:$0xff]
    %v103 = vld [vmem:[#allocation2 + $0x1e0] sm:$0xff]
    %v104 = vld [vmem:[#allocation2 + $0x1e8] sm:$0xff]
    %v105 = vld [vmem:[#allocation2 + $0x1f0] sm:$0xff]
    %v106 = vld [vmem:[#allocation2 + $0x1f8] sm:$0xff]
    %v107 = vld [vmem:[#allocation2 + $0x200] sm:$0xff]
    %v108 = vld [vmem:[#allocation2 + $0x208] sm:$0xff]
    %v109 = vld [vmem:[#allocation2 + $0x210] sm:$0xff]
    %v110 = vld [vmem:[#allocation2 + $0x218] sm:$0xff]
    %v111 = vld [vmem:[#allocation2 + $0x220] sm:$0xff]
    %v112 = vld [vmem:[#allocation2 + $0x228] sm:$0xff]
    %v113 = vld [vmem:[#allocation2 + $0x230] sm:$0xff]
    %v114 = vld [vmem:[#allocation2 + $0x238] sm:$0xff]
    %v115 = vld [vmem:[#allocation2 + $0x240] sm:$0xff]
    %v116 = vld [vmem:[#allocation2 + $0x248] sm:$0xff]
    %v117 = vld [vmem:[#allocation2 + $0x250] sm:$0xff]
    %v118 = vld [vmem:[#allocation2 + $0x258] sm:$0xff]
    %v119 = vld [vmem:[#allocation2 + $0x260] sm:$0xff]
    %v120 = vld [vmem:[#allocation2 + $0x268] sm:$0xff]
    %v121 = vld [vmem:[#allocation2 + $0x270] sm:$0xff]
    %v122 = vld [vmem:[#allocation2 + $0x278] sm:$0xff]
    %v123 = vld [vmem:[#allocation2 + $0x280] sm:$0xff]
    %v124 = vld [vmem:[#allocation2 + $0x288] sm:$0xff]
    %v125 = vld [vmem:[#allocation2 + $0x290] sm:$0xff]
    %v126 = vld [vmem:[#allocation2 + $0x298] sm:$0xff]
    %v127 = vld [vmem:[#allocation2 + $0x2a0] sm:$0xff]
    %v128 = vld [vmem:[#allocation2 + $0x2a8] sm:$0xff]
    %v129 = vld [vmem:[#allocation2 + $0x2b0] sm:$0xff]
    %v130 = vld [vmem:[#allocation2 + $0x2b8] sm:$0xff]
    %v131 = vld [vmem:[#allocation2 + $0x2c0] sm:$0xff]
    %v132 = vld [vmem:[#allocation2 + $0x2c8] sm:$0xff]
    %v133 = vld [vmem:[#allocation2 + $0x2d0] sm:$0xff]
    %v134 = vld [vmem:[#allocation2 + $0x2d8] sm:$0xff]
    %v135 = vld [vmem:[#allocation2 + $0x2e0] sm:$0xff]
    %v136 = vld [vmem:[#allocation2 + $0x2e8] sm:$0xff]
    %v137 = vld [vmem:[#allocation2 + $0x2f0] sm:$0xff]
    %v138 = vld [vmem:[#allocation2 + $0x2f8] sm:$0xff]
    %v139 = vadd.f32 %v43, %v44
    %140 = vadd.xlane.f32.xlu0 %v139
    %v141 = vpop.xlane.xlu0 %140
    %v142 = vadd.f32 %v45, %v46
    %143 = vadd.xlane.f32.xlu0 %v142
    %v144 = vpop.xlane.xlu0 %143
    %v145 = vadd.f32 %v47, %v48
    %146 = vadd.xlane.f32.xlu0 %v145
    %v147 = vpop.xlane.xlu0 %146
    %v148 = vadd.f32 %v49, %v50
    %149 = vadd.xlane.f32.xlu0 %v148
    %v150 = vpop.xlane.xlu0 %149
    %v151 = vadd.f32 %v51, %v52
    %152 = vadd.xlane.f32.xlu0 %v151
    %v153 = vpop.xlane.xlu0 %152
    %v154 = vadd.f32 %v53, %v54
    %155 = vadd.xlane.f32.xlu0 %v154
    %v156 = vpop.xlane.xlu0 %155
    %v157 = vadd.f32 %v55, %v56
    %158 = vadd.xlane.f32.xlu0 %v157
    %v159 = vpop.xlane.xlu0 %158
    %v160 = vadd.f32 %v57, %v58
    %161 = vadd.xlane.f32.xlu0 %v160
    %v162 = vpop.xlane.xlu0 %161
    %v163 = vadd.f32 %v59, %v60
    %164 = vadd.xlane.f32.xlu0 %v163
    %v165 = vpop.xlane.xlu0 %164
    %v166 = vadd.f32 %v61, %v62
    %167 = vadd.xlane.f32.xlu0 %v166
    %v168 = vpop.xlane.xlu0 %167
    %v169 = vadd.f32 %v63, %v64
    %170 = vadd.xlane.f32.xlu0 %v169
    %v171 = vpop.xlane.xlu0 %170
    %v172 = vadd.f32 %v65, %v66
    %173 = vadd.xlane.f32.xlu0 %v172
    %v174 = vpop.xlane.xlu0 %173
    %v175 = vadd.f32 %v67, %v68
    %176 = vadd.xlane.f32.xlu0 %v175
    %v177 = vpop.xlane.xlu0 %176
    %v178 = vadd.f32 %v69, %v70
    %179 = vadd.xlane.f32.xlu0 %v178
    %v180 = vpop.xlane.xlu0 %179
    %v181 = vadd.f32 %v71, %v72
    %182 = vadd.xlane.f32.xlu0 %v181
    %v183 = vpop.xlane.xlu0 %182
    %v184 = vadd.f32 %v73, %v74
    %185 = vadd.xlane.f32.xlu0 %v184
    %v186 = vpop.xlane.xlu0 %185
    %v187 = vadd.f32 %v75, %v76
    %188 = vadd.xlane.f32.xlu0 %v187
    %v189 = vpop.xlane.xlu0 %188
    %v190 = vadd.f32 %v77, %v78
    %191 = vadd.xlane.f32.xlu0 %v190
    %v192 = vpop.xlane.xlu0 %191
    %v193 = vadd.f32 %v79, %v80
    %194 = vadd.xlane.f32.xlu0 %v193
    %v195 = vpop.xlane.xlu0 %194
    %v196 = vadd.f32 %v81, %v82
    %197 = vadd.xlane.f32.xlu0 %v196
    %v198 = vpop.xlane.xlu0 %197
    %v199 = vadd.f32 %v83, %v84
    %200 = vadd.xlane.f32.xlu0 %v199
    %v201 = vpop.xlane.xlu0 %200
    %v202 = vadd.f32 %v85, %v86
    %203 = vadd.xlane.f32.xlu0 %v202
    %v204 = vpop.xlane.xlu0 %203
    %v205 = vadd.f32 %v87, %v88
    %206 = vadd.xlane.f32.xlu0 %v205
    %v207 = vpop.xlane.xlu0 %206
    %v208 = vadd.f32 %v89, %v90
    %209 = vadd.xlane.f32.xlu0 %v208
    %v210 = vpop.xlane.xlu0 %209
    %v211 = vadd.f32 %v91, %v92
    %212 = vadd.xlane.f32.xlu0 %v211
    %v213 = vpop.xlane.xlu0 %212
    %v214 = vadd.f32 %v93, %v94
    %215 = vadd.xlane.f32.xlu0 %v214
    %v216 = vpop.xlane.xlu0 %215
    %v217 = vadd.f32 %v95, %v96
    %218 = vadd.xlane.f32.xlu0 %v217
    %v219 = vpop.xlane.xlu0 %218
    %v220 = vadd.f32 %v97, %v98
    %221 = vadd.xlane.f32.xlu0 %v220
    %v222 = vpop.xlane.xlu0 %221
    %v223 = vadd.f32 %v99, %v100
    %224 = vadd.xlane.f32.xlu0 %v223
    %v225 = vpop.xlane.xlu0 %224
    %v226 = vadd.f32 %v101, %v102
    %227 = vadd.xlane.f32.xlu0 %v226
    %v228 = vpop.xlane.xlu0 %227
    %v229 = vadd.f32 %v103, %v104
    %230 = vadd.xlane.f32.xlu0 %v229
    %v231 = vpop.xlane.xlu0 %230
    %v232 = vadd.f32 %v105, %v106
    %233 = vadd.xlane.f32.xlu0 %v232
    %v234 = vpop.xlane.xlu0 %233
    %v235 = vadd.f32 %v107, %v108
    %236 = vadd.xlane.f32.xlu0 %v235
    %v237 = vpop.xlane.xlu0 %236
    %v238 = vadd.f32 %v109, %v110
    %239 = vadd.xlane.f32.xlu0 %v238
    %v240 = vpop.xlane.xlu0 %239
    %v241 = vadd.f32 %v111, %v112
    %242 = vadd.xlane.f32.xlu0 %v241
    %v243 = vpop.xlane.xlu0 %242
    %v244 = vadd.f32 %v113, %v114
    %245 = vadd.xlane.f32.xlu0 %v244
    %v246 = vpop.xlane.xlu0 %245
    %v247 = vadd.f32 %v115, %v116
    %248 = vadd.xlane.f32.xlu0 %v247
    %v249 = vpop.xlane.xlu0 %248
    %v250 = vadd.f32 %v117, %v118
    %251 = vadd.xlane.f32.xlu0 %v250
    %v252 = vpop.xlane.xlu0 %251
    %v253 = vadd.f32 %v119, %v120
    %254 = vadd.xlane.f32.xlu0 %v253
    %v255 = vpop.xlane.xlu0 %254
    %v256 = vadd.f32 %v121, %v122
    %257 = vadd.xlane.f32.xlu0 %v256
    %v258 = vpop.xlane.xlu0 %257
    %v259 = vadd.f32 %v123, %v124
    %260 = vadd.xlane.f32.xlu0 %v259
    %v261 = vpop.xlane.xlu0 %260
    %v262 = vadd.f32 %v125, %v126
    %263 = vadd.xlane.f32.xlu0 %v262
    %v264 = vpop.xlane.xlu0 %263
    %v265 = vadd.f32 %v127, %v128
    %266 = vadd.xlane.f32.xlu0 %v265
    %v267 = vpop.xlane.xlu0 %266
    %v268 = vadd.f32 %v129, %v130
    %269 = vadd.xlane.f32.xlu0 %v268
    %v270 = vpop.xlane.xlu0 %269
    %v271 = vadd.f32 %v131, %v132
    %272 = vadd.xlane.f32.xlu0 %v271
    %v273 = vpop.xlane.xlu0 %272
    %v274 = vadd.f32 %v133, %v134
    %275 = vadd.xlane.f32.xlu0 %v274
    %v276 = vpop.xlane.xlu0 %275
    %v277 = vadd.f32 %v135, %v136
    %278 = vadd.xlane.f32.xlu0 %v277
    %v279 = vpop.xlane.xlu0 %278
    %v280 = vadd.f32 %v137, %v138
    %281 = vadd.xlane.f32.xlu0 %v280
    %v282 = vpop.xlane.xlu0 %281
    %v283 = vrcp.pop 256.0
    %v284 = vmul.f32 %v141, %v283
    %v285 = vmul.f32 %v144, %v283
    %v286 = vmul.f32 %v147, %v283
    %v287 = vmul.f32 %v150, %v283
    %v288 = vmul.f32 %v153, %v283
    %v289 = vmul.f32 %v156, %v283
    %v290 = vmul.f32 %v159, %v283
    %v291 = vmul.f32 %v162, %v283
    %v292 = vmul.f32 %v165, %v283
    %v293 = vmul.f32 %v168, %v283
    %v294 = vmul.f32 %v171, %v283
    %v295 = vmul.f32 %v174, %v283
    %v296 = vmul.f32 %v177, %v283
    %v297 = vmul.f32 %v180, %v283
    %v298 = vmul.f32 %v183, %v283
    %v299 = vmul.f32 %v186, %v283
    %v300 = vmul.f32 %v189, %v283
    %v301 = vmul.f32 %v192, %v283
    %v302 = vmul.f32 %v195, %v283
    %v303 = vmul.f32 %v198, %v283
    %v304 = vmul.f32 %v201, %v283
    %v305 = vmul.f32 %v204, %v283
    %v306 = vmul.f32 %v207, %v283
    %v307 = vmul.f32 %v210, %v283
    %v308 = vmul.f32 %v213, %v283
    %v309 = vmul.f32 %v216, %v283
    %v310 = vmul.f32 %v219, %v283
    %v311 = vmul.f32 %v222, %v283
    %v312 = vmul.f32 %v225, %v283
    %v313 = vmul.f32 %v228, %v283
    %v314 = vmul.f32 %v231, %v283
    %v315 = vmul.f32 %v234, %v283
    %v316 = vmul.f32 %v237, %v283
    %v317 = vmul.f32 %v240, %v283
    %v318 = vmul.f32 %v243, %v283
    %v319 = vmul.f32 %v246, %v283
    %v320 = vmul.f32 %v249, %v283
    %v321 = vmul.f32 %v252, %v283
    %v322 = vmul.f32 %v255, %v283
    %v323 = vmul.f32 %v258, %v283
    %v324 = vmul.f32 %v261, %v283
    %v325 = vmul.f32 %v264, %v283
    %v326 = vmul.f32 %v267, %v283
    %v327 = vmul.f32 %v270, %v283
    %v328 = vmul.f32 %v273, %v283
    %v329 = vmul.f32 %v276, %v283
    %v330 = vmul.f32 %v279, %v283
    %v331 = vmul.f32 %v282, %v283
    %v332 = vsub.f32 %v43, %v284
    %v333 = vsub.f32 %v44, %v284
    %v334 = vsub.f32 %v45, %v285
    %v335 = vsub.f32 %v46, %v285
    %v336 = vsub.f32 %v47, %v286
    %v337 = vsub.f32 %v48, %v286
    %v338 = vsub.f32 %v49, %v287
    %v339 = vsub.f32 %v50, %v287
    %v340 = vsub.f32 %v51, %v288
    %v341 = vsub.f32 %v52, %v288
    %v342 = vsub.f32 %v53, %v289
    %v343 = vsub.f32 %v54, %v289
    %v344 = vsub.f32 %v55, %v290
    %v345 = vsub.f32 %v56, %v290
    %v346 = vsub.f32 %v57, %v291
    %v347 = vsub.f32 %v58, %v291
    %v348 = vsub.f32 %v59, %v292
    %v349 = vsub.f32 %v60, %v292
    %v350 = vsub.f32 %v61, %v293
    %v351 = vsub.f32 %v62, %v293
    %v352 = vsub.f32 %v63, %v294
    %v353 = vsub.f32 %v64, %v294
    %v354 = vsub.f32 %v65, %v295
    %v355 = vsub.f32 %v66, %v295
    %v356 = vsub.f32 %v67, %v296
    %v357 = vsub.f32 %v68, %v296
    %v358 = vsub.f32 %v69, %v297
    %v359 = vsub.f32 %v70, %v297
    %v360 = vsub.f32 %v71, %v298
    %v361 = vsub.f32 %v72, %v298
    %v362 = vsub.f32 %v73, %v299
    %v363 = vsub.f32 %v74, %v299
    %v364 = vsub.f32 %v75, %v300
    %v365 = vsub.f32 %v76, %v300
    %v366 = vsub.f32 %v77, %v301
    %v367 = vsub.f32 %v78, %v301
    %v368 = vsub.f32 %v79, %v302
    %v369 = vsub.f32 %v80, %v302
    %v370 = vsub.f32 %v81, %v303
    %v371 = vsub.f32 %v82, %v303
    %v372 = vsub.f32 %v83, %v304
    %v373 = vsub.f32 %v84, %v304
    %v374 = vsub.f32 %v85, %v305
    %v375 = vsub.f32 %v86, %v305
    %v376 = vsub.f32 %v87, %v306
    %v377 = vsub.f32 %v88, %v306
    %v378 = vsub.f32 %v89, %v307
    %v379 = vsub.f32 %v90, %v307
    %v380 = vsub.f32 %v91, %v308
    %v381 = vsub.f32 %v92, %v308
    %v382 = vsub.f32 %v93, %v309
    %v383 = vsub.f32 %v94, %v309
    %v384 = vsub.f32 %v95, %v310
    %v385 = vsub.f32 %v96, %v310
    %v386 = vsub.f32 %v97, %v311
    %v387 = vsub.f32 %v98, %v311
    %v388 = vsub.f32 %v99, %v312
    %v389 = vsub.f32 %v100, %v312
    %v390 = vsub.f32 %v101, %v313
    %v391 = vsub.f32 %v102, %v313
    %v392 = vsub.f32 %v103, %v314
    %v393 = vsub.f32 %v104, %v314
    %v394 = vsub.f32 %v105, %v315
    %v395 = vsub.f32 %v106, %v315
    %v396 = vsub.f32 %v107, %v316
    %v397 = vsub.f32 %v108, %v316
    %v398 = vsub.f32 %v109, %v317
    %v399 = vsub.f32 %v110, %v317
    %v400 = vsub.f32 %v111, %v318
    %v401 = vsub.f32 %v112, %v318
    %v402 = vsub.f32 %v113, %v319
    %v403 = vsub.f32 %v114, %v319
    %v404 = vsub.f32 %v115, %v320
    %v405 = vsub.f32 %v116, %v320
    %v406 = vsub.f32 %v117, %v321
    %v407 = vsub.f32 %v118, %v321
    %v408 = vsub.f32 %v119, %v322
    %v409 = vsub.f32 %v120, %v322
    %v410 = vsub.f32 %v121, %v323
    %v411 = vsub.f32 %v122, %v323
    %v412 = vsub.f32 %v123, %v324
    %v413 = vsub.f32 %v124, %v324
    %v414 = vsub.f32 %v125, %v325
    %v415 = vsub.f32 %v126, %v325
    %v416 = vsub.f32 %v127, %v326
    %v417 = vsub.f32 %v128, %v326
    %v418 = vsub.f32 %v129, %v327
    %v419 = vsub.f32 %v130, %v327
    %v420 = vsub.f32 %v131, %v328
    %v421 = vsub.f32 %v132, %v328
    %v422 = vsub.f32 %v133, %v329
    %v423 = vsub.f32 %v134, %v329
    %v424 = vsub.f32 %v135, %v330
    %v425 = vsub.f32 %v136, %v330
    %v426 = vsub.f32 %v137, %v331
    %v427 = vsub.f32 %v138, %v331
    %v428 = vmul.f32 %v332, %v332
    %v429 = vmul.f32 %v333, %v333
    %v430 = vmul.f32 %v334, %v334
    %v431 = vmul.f32 %v335, %v335
    %v432 = vmul.f32 %v336, %v336
    %v433 = vmul.f32 %v337, %v337
    %v434 = vmul.f32 %v338, %v338
    %v435 = vmul.f32 %v339, %v339
    %v436 = vmul.f32 %v340, %v340
    %v437 = vmul.f32 %v341, %v341
    %v438 = vmul.f32 %v342, %v342
    %v439 = vmul.f32 %v343, %v343
    %v440 = vmul.f32 %v344, %v344
    %v441 = vmul.f32 %v345, %v345
    %v442 = vmul.f32 %v346, %v346
    %v443 = vmul.f32 %v347, %v347
    %v444 = vmul.f32 %v348, %v348
    %v445 = vmul.f32 %v349, %v349
    %v446 = vmul.f32 %v350, %v350
    %v447 = vmul.f32 %v351, %v351
    %v448 = vmul.f32 %v352, %v352
    %v449 = vmul.f32 %v353, %v353
    %v450 = vmul.f32 %v354, %v354
    %v451 = vmul.f32 %v355, %v355
    %v452 = vmul.f32 %v356, %v356
    %v453 = vmul.f32 %v357, %v357
    %v454 = vmul.f32 %v358, %v358
    %v455 = vmul.f32 %v359, %v359
    %v456 = vmul.f32 %v360, %v360
    %v457 = vmul.f32 %v361, %v361
    %v458 = vmul.f32 %v362, %v362
    %v459 = vmul.f32 %v363, %v363
    %v460 = vmul.f32 %v364, %v364
    %v461 = vmul.f32 %v365, %v365
    %v462 = vmul.f32 %v366, %v366
    %v463 = vmul.f32 %v367, %v367
    %v464 = vmul.f32 %v368, %v368
    %v465 = vmul.f32 %v369, %v369
    %v466 = vmul.f32 %v370, %v370
    %v467 = vmul.f32 %v371, %v371
    %v468 = vmul.f32 %v372, %v372
    %v469 = vmul.f32 %v373, %v373
    %v470 = vmul.f32 %v374, %v374
    %v471 = vmul.f32 %v375, %v375
    %v472 = vmul.f32 %v376, %v376
    %v473 = vmul.f32 %v377, %v377
    %v474 = vmul.f32 %v378, %v378
    %v475 = vmul.f32 %v379, %v379
    %v476 = vmul.f32 %v380, %v380
    %v477 = vmul.f32 %v381, %v381
    %v478 = vmul.f32 %v382, %v382
    %v479 = vmul.f32 %v383, %v383
    %v480 = vmul.f32 %v384, %v384
    %v481 = vmul.f32 %v385, %v385
    %v482 = vmul.f32 %v386, %v386
    %v483 = vmul.f32 %v387, %v387
    %v484 = vmul.f32 %v388, %v388
    %v485 = vmul.f32 %v389, %v389
    %v486 = vmul.f32 %v390, %v390
    %v487 = vmul.f32 %v391, %v391
    %v488 = vmul.f32 %v392, %v392
    %v489 = vmul.f32 %v393, %v393
    %v490 = vmul.f32 %v394, %v394
    %v491 = vmul.f32 %v395, %v395
    %v492 = vmul.f32 %v396, %v396
    %v493 = vmul.f32 %v397, %v397
    %v494 = vmul.f32 %v398, %v398
    %v495 = vmul.f32 %v399, %v399
    %v496 = vmul.f32 %v400, %v400
    %v497 = vmul.f32 %v401, %v401
    %v498 = vmul.f32 %v402, %v402
    %v499 = vmul.f32 %v403, %v403
    %v500 = vmul.f32 %v404, %v404
    %v501 = vmul.f32 %v405, %v405
    %v502 = vmul.f32 %v406, %v406
    %v503 = vmul.f32 %v407, %v407
    %v504 = vmul.f32 %v408, %v408
    %v505 = vmul.f32 %v409, %v409
    %v506 = vmul.f32 %v410, %v410
    %v507 = vmul.f32 %v411, %v411
    %v508 = vmul.f32 %v412, %v412
    %v509 = vmul.f32 %v413, %v413
    %v510 = vmul.f32 %v414, %v414
    %v511 = vmul.f32 %v415, %v415
    %v512 = vmul.f32 %v416, %v416
    %v513 = vmul.f32 %v417, %v417
    %v514 = vmul.f32 %v418, %v418
    %v515 = vmul.f32 %v419, %v419
    %v516 = vmul.f32 %v420, %v420
    %v517 = vmul.f32 %v421, %v421
    %v518 = vmul.f32 %v422, %v422
    %v519 = vmul.f32 %v423, %v423
    %v520 = vmul.f32 %v424, %v424
    %v521 = vmul.f32 %v425, %v425
    %v522 = vmul.f32 %v426, %v426
    %v523 = vmul.f32 %v427, %v427
    %v524 = vadd.f32 %v428, %v429
    %525 = vadd.xlane.f32.xlu0 %v524
    %v526 = vpop.xlane.xlu0 %525
    %v527 = vadd.f32 %v430, %v431
    %528 = vadd.xlane.f32.xlu0 %v527
    %v529 = vpop.xlane.xlu0 %528
    %v530 = vadd.f32 %v432, %v433
    %531 = vadd.xlane.f32.xlu0 %v530
    %v532 = vpop.xlane.xlu0 %531
    %v533 = vadd.f32 %v434, %v435
    %534 = vadd.xlane.f32.xlu0 %v533
    %v535 = vpop.xlane.xlu0 %534
    %v536 = vadd.f32 %v436, %v437
    %537 = vadd.xlane.f32.xlu0 %v536
    %v538 = vpop.xlane.xlu0 %537
    %v539 = vadd.f32 %v438, %v439
    %540 = vadd.xlane.f32.xlu0 %v539
    %v541 = vpop.xlane.xlu0 %540
    %v542 = vadd.f32 %v440, %v441
    %543 = vadd.xlane.f32.xlu0 %v542
    %v544 = vpop.xlane.xlu0 %543
    %v545 = vadd.f32 %v442, %v443
    %546 = vadd.xlane.f32.xlu0 %v545
    %v547 = vpop.xlane.xlu0 %546
    %v548 = vadd.f32 %v444, %v445
    %549 = vadd.xlane.f32.xlu0 %v548
    %v550 = vpop.xlane.xlu0 %549
    %v551 = vadd.f32 %v446, %v447
    %552 = vadd.xlane.f32.xlu0 %v551
    %v553 = vpop.xlane.xlu0 %552
    %v554 = vadd.f32 %v448, %v449
    %555 = vadd.xlane.f32.xlu0 %v554
    %v556 = vpop.xlane.xlu0 %555
    %v557 = vadd.f32 %v450, %v451
    %558 = vadd.xlane.f32.xlu0 %v557
    %v559 = vpop.xlane.xlu0 %558
    %v560 = vadd.f32 %v452, %v453
    %561 = vadd.xlane.f32.xlu0 %v560
    %v562 = vpop.xlane.xlu0 %561
    %v563 = vadd.f32 %v454, %v455
    %564 = vadd.xlane.f32.xlu0 %v563
    %v565 = vpop.xlane.xlu0 %564
    %v566 = vadd.f32 %v456, %v457
    %567 = vadd.xlane.f32.xlu0 %v566
    %v568 = vpop.xlane.xlu0 %567
    %v569 = vadd.f32 %v458, %v459
    %570 = vadd.xlane.f32.xlu0 %v569
    %v571 = vpop.xlane.xlu0 %570
    %v572 = vadd.f32 %v460, %v461
    %573 = vadd.xlane.f32.xlu0 %v572
    %v574 = vpop.xlane.xlu0 %573
    %v575 = vadd.f32 %v462, %v463
    %576 = vadd.xlane.f32.xlu0 %v575
    %v577 = vpop.xlane.xlu0 %576
    %v578 = vadd.f32 %v464, %v465
    %579 = vadd.xlane.f32.xlu0 %v578
    %v580 = vpop.xlane.xlu0 %579
    %v581 = vadd.f32 %v466, %v467
    %582 = vadd.xlane.f32.xlu0 %v581
    %v583 = vpop.xlane.xlu0 %582
    %v584 = vadd.f32 %v468, %v469
    %585 = vadd.xlane.f32.xlu0 %v584
    %v586 = vpop.xlane.xlu0 %585
    %v587 = vadd.f32 %v470, %v471
    %588 = vadd.xlane.f32.xlu0 %v587
    %v589 = vpop.xlane.xlu0 %588
    %v590 = vadd.f32 %v472, %v473
    %591 = vadd.xlane.f32.xlu0 %v590
    %v592 = vpop.xlane.xlu0 %591
    %v593 = vadd.f32 %v474, %v475
    %594 = vadd.xlane.f32.xlu0 %v593
    %v595 = vpop.xlane.xlu0 %594
    %v596 = vadd.f32 %v476, %v477
    %597 = vadd.xlane.f32.xlu0 %v596
    %v598 = vpop.xlane.xlu0 %597
    %v599 = vadd.f32 %v478, %v479
    %600 = vadd.xlane.f32.xlu0 %v599
    %v601 = vpop.xlane.xlu0 %600
    %v602 = vadd.f32 %v480, %v481
    %603 = vadd.xlane.f32.xlu0 %v602
    %v604 = vpop.xlane.xlu0 %603
    %v605 = vadd.f32 %v482, %v483
    %606 = vadd.xlane.f32.xlu0 %v605
    %v607 = vpop.xlane.xlu0 %606
    %v608 = vadd.f32 %v484, %v485
    %609 = vadd.xlane.f32.xlu0 %v608
    %v610 = vpop.xlane.xlu0 %609
    %v611 = vadd.f32 %v486, %v487
    %612 = vadd.xlane.f32.xlu0 %v611
    %v613 = vpop.xlane.xlu0 %612
    %v614 = vadd.f32 %v488, %v489
    %615 = vadd.xlane.f32.xlu0 %v614
    %v616 = vpop.xlane.xlu0 %615
    %v617 = vadd.f32 %v490, %v491
    %618 = vadd.xlane.f32.xlu0 %v617
    %v619 = vpop.xlane.xlu0 %618
    %v620 = vadd.f32 %v492, %v493
    %621 = vadd.xlane.f32.xlu0 %v620
    %v622 = vpop.xlane.xlu0 %621
    %v623 = vadd.f32 %v494, %v495
    %624 = vadd.xlane.f32.xlu0 %v623
    %v625 = vpop.xlane.xlu0 %624
    %v626 = vadd.f32 %v496, %v497
    %627 = vadd.xlane.f32.xlu0 %v626
    %v628 = vpop.xlane.xlu0 %627
    %v629 = vadd.f32 %v498, %v499
    %630 = vadd.xlane.f32.xlu0 %v629
    %v631 = vpop.xlane.xlu0 %630
    %v632 = vadd.f32 %v500, %v501
    %633 = vadd.xlane.f32.xlu0 %v632
    %v634 = vpop.xlane.xlu0 %633
    %v635 = vadd.f32 %v502, %v503
    %636 = vadd.xlane.f32.xlu0 %v635
    %v637 = vpop.xlane.xlu0 %636
    %v638 = vadd.f32 %v504, %v505
    %639 = vadd.xlane.f32.xlu0 %v638
    %v640 = vpop.xlane.xlu0 %639
    %v641 = vadd.f32 %v506, %v507
    %642 = vadd.xlane.f32.xlu0 %v641
    %v643 = vpop.xlane.xlu0 %642
    %v644 = vadd.f32 %v508, %v509
    %645 = vadd.xlane.f32.xlu0 %v644
    %v646 = vpop.xlane.xlu0 %645
    %v647 = vadd.f32 %v510, %v511
    %648 = vadd.xlane.f32.xlu0 %v647
    %v649 = vpop.xlane.xlu0 %648
    %v650 = vadd.f32 %v512, %v513
    %651 = vadd.xlane.f32.xlu0 %v650
    %v652 = vpop.xlane.xlu0 %651
    %v653 = vadd.f32 %v514, %v515
    %654 = vadd.xlane.f32.xlu0 %v653
    %v655 = vpop.xlane.xlu0 %654
    %v656 = vadd.f32 %v516, %v517
    %657 = vadd.xlane.f32.xlu0 %v656
    %v658 = vpop.xlane.xlu0 %657
    %v659 = vadd.f32 %v518, %v519
    %660 = vadd.xlane.f32.xlu0 %v659
    %v661 = vpop.xlane.xlu0 %660
    %v662 = vadd.f32 %v520, %v521
    %663 = vadd.xlane.f32.xlu0 %v662
    %v664 = vpop.xlane.xlu0 %663
    %v665 = vadd.f32 %v522, %v523
    %666 = vadd.xlane.f32.xlu0 %v665
    %v667 = vpop.xlane.xlu0 %666
    %v668 = vmul.f32 %v526, %v283
    %v669 = vmul.f32 %v529, %v283
    %v670 = vmul.f32 %v532, %v283
    %v671 = vmul.f32 %v535, %v283
    %v672 = vmul.f32 %v538, %v283
    %v673 = vmul.f32 %v541, %v283
    %v674 = vmul.f32 %v544, %v283
    %v675 = vmul.f32 %v547, %v283
    %v676 = vmul.f32 %v550, %v283
    %v677 = vmul.f32 %v553, %v283
    %v678 = vmul.f32 %v556, %v283
    %v679 = vmul.f32 %v559, %v283
    %v680 = vmul.f32 %v562, %v283
    %v681 = vmul.f32 %v565, %v283
    %v682 = vmul.f32 %v568, %v283
    %v683 = vmul.f32 %v571, %v283
    %v684 = vmul.f32 %v574, %v283
    %v685 = vmul.f32 %v577, %v283
    %v686 = vmul.f32 %v580, %v283
    %v687 = vmul.f32 %v583, %v283
    %v688 = vmul.f32 %v586, %v283
    %v689 = vmul.f32 %v589, %v283
    %v690 = vmul.f32 %v592, %v283
    %v691 = vmul.f32 %v595, %v283
    %v692 = vmul.f32 %v598, %v283
    %v693 = vmul.f32 %v601, %v283
    %v694 = vmul.f32 %v604, %v283
    %v695 = vmul.f32 %v607, %v283
    %v696 = vmul.f32 %v610, %v283
    %v697 = vmul.f32 %v613, %v283
    %v698 = vmul.f32 %v616, %v283
    %v699 = vmul.f32 %v619, %v283
    %v700 = vmul.f32 %v622, %v283
    %v701 = vmul.f32 %v625, %v283
    %v702 = vmul.f32 %v628, %v283
    %v703 = vmul.f32 %v631, %v283
    %v704 = vmul.f32 %v634, %v283
    %v705 = vmul.f32 %v637, %v283
    %v706 = vmul.f32 %v640, %v283
    %v707 = vmul.f32 %v643, %v283
    %v708 = vmul.f32 %v646, %v283
    %v709 = vmul.f32 %v649, %v283
    %v710 = vmul.f32 %v652, %v283
    %v711 = vmul.f32 %v655, %v283
    %v712 = vmul.f32 %v658, %v283
    %v713 = vmul.f32 %v661, %v283
    %v714 = vmul.f32 %v664, %v283
    %v715 = vmul.f32 %v667, %v283
    %v716 = vadd.f32 %v668, 1e-12
    %v717 = vadd.f32 %v669, 1e-12
    %v718 = vadd.f32 %v670, 1e-12
    %v719 = vadd.f32 %v671, 1e-12
    %v720 = vadd.f32 %v672, 1e-12
    %v721 = vadd.f32 %v673, 1e-12
    %v722 = vadd.f32 %v674, 1e-12
    %v723 = vadd.f32 %v675, 1e-12
    %v724 = vadd.f32 %v676, 1e-12
    %v725 = vadd.f32 %v677, 1e-12
    %v726 = vadd.f32 %v678, 1e-12
    %v727 = vadd.f32 %v679, 1e-12
    %v728 = vadd.f32 %v680, 1e-12
    %v729 = vadd.f32 %v681, 1e-12
    %v730 = vadd.f32 %v682, 1e-12
    %v731 = vadd.f32 %v683, 1e-12
    %v732 = vadd.f32 %v684, 1e-12
    %v733 = vadd.f32 %v685, 1e-12
    %v734 = vadd.f32 %v686, 1e-12
    %v735 = vadd.f32 %v687, 1e-12
    %v736 = vadd.f32 %v688, 1e-12
    %v737 = vadd.f32 %v689, 1e-12
    %v738 = vadd.f32 %v690, 1e-12
    %v739 = vadd.f32 %v691, 1e-12
    %v740 = vadd.f32 %v692, 1e-12
    %v741 = vadd.f32 %v693, 1e-12
    %v742 = vadd.f32 %v694, 1e-12
    %v743 = vadd.f32 %v695, 1e-12
    %v744 = vadd.f32 %v696, 1e-12
    %v745 = vadd.f32 %v697, 1e-12
    %v746 = vadd.f32 %v698, 1e-12
    %v747 = vadd.f32 %v699, 1e-12
    %v748 = vadd.f32 %v700, 1e-12
    %v749 = vadd.f32 %v701, 1e-12
    %v750 = vadd.f32 %v702, 1e-12
    %v751 = vadd.f32 %v703, 1e-12
    %v752 = vadd.f32 %v704, 1e-12
    %v753 = vadd.f32 %v705, 1e-12
    %v754 = vadd.f32 %v706, 1e-12
    %v755 = vadd.f32 %v707, 1e-12
    %v756 = vadd.f32 %v708, 1e-12
    %v757 = vadd.f32 %v709, 1e-12
    %v758 = vadd.f32 %v710, 1e-12
    %v759 = vadd.f32 %v711, 1e-12
    %v760 = vadd.f32 %v712, 1e-12
    %v761 = vadd.f32 %v713, 1e-12
    %v762 = vadd.f32 %v714, 1e-12
    %v763 = vadd.f32 %v715, 1e-12
    %v764 = vrsqrt.pop %v716
    %v765 = vrsqrt.pop %v717
    %v766 = vrsqrt.pop %v718
    %v767 = vrsqrt.pop %v719
    %v768 = vrsqrt.pop %v720
    %v769 = vrsqrt.pop %v721
    %v770 = vrsqrt.pop %v722
    %v771 = vrsqrt.pop %v723
    %v772 = vrsqrt.pop %v724
    %v773 = vrsqrt.pop %v725
    %v774 = vrsqrt.pop %v726
    %v775 = vrsqrt.pop %v727
    %v776 = vrsqrt.pop %v728
    %v777 = vrsqrt.pop %v729
    %v778 = vrsqrt.pop %v730
    %v779 = vrsqrt.pop %v731
    %v780 = vrsqrt.pop %v732
    %v781 = vrsqrt.pop %v733
    %v782 = vrsqrt.pop %v734
    %v783 = vrsqrt.pop %v735
    %v784 = vrsqrt.pop %v736
    %v785 = vrsqrt.pop %v737
    %v786 = vrsqrt.pop %v738
    %v787 = vrsqrt.pop %v739
    %v788 = vrsqrt.pop %v740
    %v789 = vrsqrt.pop %v741
    %v790 = vrsqrt.pop %v742
    %v791 = vrsqrt.pop %v743
    %v792 = vrsqrt.pop %v744
    %v793 = vrsqrt.pop %v745
    %v794 = vrsqrt.pop %v746
    %v795 = vrsqrt.pop %v747
    %v796 = vrsqrt.pop %v748
    %v797 = vrsqrt.pop %v749
    %v798 = vrsqrt.pop %v750
    %v799 = vrsqrt.pop %v751
    %v800 = vrsqrt.pop %v752
    %v801 = vrsqrt.pop %v753
    %v802 = vrsqrt.pop %v754
    %v803 = vrsqrt.pop %v755
    %v804 = vrsqrt.pop %v756
    %v805 = vrsqrt.pop %v757
    %v806 = vrsqrt.pop %v758
    %v807 = vrsqrt.pop %v759
    %v808 = vrsqrt.pop %v760
    %v809 = vrsqrt.pop %v761
    %v810 = vrsqrt.pop %v762
    %v811 = vrsqrt.pop %v763
    %v812 = vpack.c.bf16 %v334, %v332
    %v813 = vpack.c.bf16 %v335, %v333
    %v814 = vpack.c.bf16 %v338, %v336
    %v815 = vpack.c.bf16 %v339, %v337
    %v816 = vpack.c.bf16 %v342, %v340
    %v817 = vpack.c.bf16 %v343, %v341
    %v818 = vpack.c.bf16 %v346, %v344
    %v819 = vpack.c.bf16 %v347, %v345
    %v820 = vpack.c.bf16 %v350, %v348
    %v821 = vpack.c.bf16 %v351, %v349
    %v822 = vpack.c.bf16 %v354, %v352
    %v823 = vpack.c.bf16 %v355, %v353
    %v824 = vpack.c.bf16 %v358, %v356
    %v825 = vpack.c.bf16 %v359, %v357
    %v826 = vpack.c.bf16 %v362, %v360
    %v827 = vpack.c.bf16 %v363, %v361
    %v828 = vpack.c.bf16 %v366, %v364
    %v829 = vpack.c.bf16 %v367, %v365
    %v830 = vpack.c.bf16 %v370, %v368
    %v831 = vpack.c.bf16 %v371, %v369
    %v832 = vpack.c.bf16 %v374, %v372
    %v833 = vpack.c.bf16 %v375, %v373
    %v834 = vpack.c.bf16 %v378, %v376
    %v835 = vpack.c.bf16 %v379, %v377
    %v836 = vpack.c.bf16 %v382, %v380
    %v837 = vpack.c.bf16 %v383, %v381
    %v838 = vpack.c.bf16 %v386, %v384
    %v839 = vpack.c.bf16 %v387, %v385
    %v840 = vpack.c.bf16 %v390, %v388
    %v841 = vpack.c.bf16 %v391, %v389
    %v842 = vpack.c.bf16 %v394, %v392
    %v843 = vpack.c.bf16 %v395, %v393
    %v844 = vpack.c.bf16 %v398, %v396
    %v845 = vpack.c.bf16 %v399, %v397
    %v846 = vpack.c.bf16 %v402, %v400
    %v847 = vpack.c.bf16 %v403, %v401
    %v848 = vpack.c.bf16 %v406, %v404
    %v849 = vpack.c.bf16 %v407, %v405
    %v850 = vpack.c.bf16 %v410, %v408
    %v851 = vpack.c.bf16 %v411, %v409
    %v852 = vpack.c.bf16 %v414, %v412
    %v853 = vpack.c.bf16 %v415, %v413
    %v854 = vpack.c.bf16 %v418, %v416
    %v855 = vpack.c.bf16 %v419, %v417
    %v856 = vpack.c.bf16 %v422, %v420
    %v857 = vpack.c.bf16 %v423, %v421
    %v858 = vpack.c.bf16 %v426, %v424
    %v859 = vpack.c.bf16 %v427, %v425
    %v860 = vld [vmem:[#allocation5] sm:$0xff]
    %v861 = vld [vmem:[#allocation5 + $0x8] sm:$0xff]
    %v862 = vld [vmem:[#allocation5 + $0x10] sm:$0xff]
    %v863 = vld [vmem:[#allocation5 + $0x18] sm:$0xff]
    %v864 = vld [vmem:[#allocation5 + $0x20] sm:$0xff]
    %v865 = vld [vmem:[#allocation5 + $0x28] sm:$0xff]
    %v866 = vld [vmem:[#allocation5 + $0x30] sm:$0xff]
    %v867 = vld [vmem:[#allocation5 + $0x38] sm:$0xff]
    %v868 = vld [vmem:[#allocation5 + $0x40] sm:$0xff]
    %v869 = vld [vmem:[#allocation5 + $0x48] sm:$0xff]
    %v870 = vld [vmem:[#allocation5 + $0x50] sm:$0xff]
    %v871 = vld [vmem:[#allocation5 + $0x58] sm:$0xff]
    %v872 = vld [vmem:[#allocation5 + $0x60] sm:$0xff]
    %v873 = vld [vmem:[#allocation5 + $0x68] sm:$0xff]
    %v874 = vld [vmem:[#allocation5 + $0x70] sm:$0xff]
    %v875 = vld [vmem:[#allocation5 + $0x78] sm:$0xff]
    %v876 = vld [vmem:[#allocation5 + $0x80] sm:$0xff]
    %v877 = vld [vmem:[#allocation5 + $0x88] sm:$0xff]
    %v878 = vld [vmem:[#allocation5 + $0x90] sm:$0xff]
    %v879 = vld [vmem:[#allocation5 + $0x98] sm:$0xff]
    %v880 = vld [vmem:[#allocation5 + $0xa0] sm:$0xff]
    %v881 = vld [vmem:[#allocation5 + $0xa8] sm:$0xff]
    %v882 = vld [vmem:[#allocation5 + $0xb0] sm:$0xff]
    %v883 = vld [vmem:[#allocation5 + $0xb8] sm:$0xff]
    %v884 = vld [vmem:[#allocation5 + $0xc0] sm:$0xff]
    %v885 = vld [vmem:[#allocation5 + $0xc8] sm:$0xff]
    %v886 = vld [vmem:[#allocation5 + $0xd0] sm:$0xff]
    %v887 = vld [vmem:[#allocation5 + $0xd8] sm:$0xff]
    %v888 = vld [vmem:[#allocation5 + $0xe0] sm:$0xff]
    %v889 = vld [vmem:[#allocation5 + $0xe8] sm:$0xff]
    %v890 = vld [vmem:[#allocation5 + $0xf0] sm:$0xff]
    %v891 = vld [vmem:[#allocation5 + $0xf8] sm:$0xff]
    %v924 = vunpack.c.l.b16 %v860
    %v925 = vunpack.c.h.b16 %v860
    %v926 = vunpack.c.l.b16 %v861
    %v927 = vunpack.c.h.b16 %v861
    %v928 = vunpack.c.l.b16 %v862
    %v929 = vunpack.c.h.b16 %v862
    %v930 = vunpack.c.l.b16 %v863
    %v931 = vunpack.c.h.b16 %v863
    %v932 = vunpack.c.l.b16 %v864
    %v933 = vunpack.c.h.b16 %v864
    %v934 = vunpack.c.l.b16 %v865
    %v935 = vunpack.c.h.b16 %v865
    %v936 = vunpack.c.l.b16 %v866
    %v937 = vunpack.c.h.b16 %v866
    %v938 = vunpack.c.l.b16 %v867
    %v939 = vunpack.c.h.b16 %v867
    %v940 = vunpack.c.l.b16 %v868
    %v941 = vunpack.c.h.b16 %v868
    %v942 = vunpack.c.l.b16 %v869
    %v943 = vunpack.c.h.b16 %v869
    %v944 = vunpack.c.l.b16 %v870
    %v945 = vunpack.c.h.b16 %v870
    %v946 = vunpack.c.l.b16 %v871
    %v947 = vunpack.c.h.b16 %v871
    %v948 = vunpack.c.l.b16 %v872
    %v949 = vunpack.c.h.b16 %v872
    %v950 = vunpack.c.l.b16 %v873
    %v951 = vunpack.c.h.b16 %v873
    %v952 = vunpack.c.l.b16 %v874
    %v953 = vunpack.c.h.b16 %v874
    %v954 = vunpack.c.l.b16 %v875
    %v955 = vunpack.c.h.b16 %v875
    %v956 = vunpack.c.l.b16 %v876
    %v957 = vunpack.c.h.b16 %v876
    %v958 = vunpack.c.l.b16 %v877
    %v959 = vunpack.c.h.b16 %v877
    %v960 = vunpack.c.l.b16 %v878
    %v961 = vunpack.c.h.b16 %v878
    %v962 = vunpack.c.l.b16 %v879
    %v963 = vunpack.c.h.b16 %v879
    %v964 = vunpack.c.l.b16 %v880
    %v965 = vunpack.c.h.b16 %v880
    %v966 = vunpack.c.l.b16 %v881
    %v967 = vunpack.c.h.b16 %v881
    %v968 = vunpack.c.l.b16 %v882
    %v969 = vunpack.c.h.b16 %v882
    %v970 = vunpack.c.l.b16 %v883
    %v971 = vunpack.c.h.b16 %v883
    %v972 = vunpack.c.l.b16 %v884
    %v973 = vunpack.c.h.b16 %v884
    %v974 = vunpack.c.l.b16 %v885
    %v975 = vunpack.c.h.b16 %v885
    %v976 = vunpack.c.l.b16 %v886
    %v977 = vunpack.c.h.b16 %v886
    %v978 = vunpack.c.l.b16 %v887
    %v979 = vunpack.c.h.b16 %v887
    %v980 = vunpack.c.l.b16 %v888
    %v981 = vunpack.c.h.b16 %v888
    %v982 = vunpack.c.l.b16 %v889
    %v983 = vunpack.c.h.b16 %v889
    %v984 = vunpack.c.l.b16 %v890
    %v985 = vunpack.c.h.b16 %v890
    %v986 = vunpack.c.l.b16 %v891
    %v987 = vunpack.c.h.b16 %v891
    %v988 = vpack.c.b16 %v926, %v924
    %v989 = vpack.c.b16 %v927, %v925
    %v990 = vpack.c.b16 %v930, %v928
    %v991 = vpack.c.b16 %v931, %v929
    %v992 = vpack.c.b16 %v934, %v932
    %v993 = vpack.c.b16 %v935, %v933
    %v994 = vpack.c.b16 %v938, %v936
    %v995 = vpack.c.b16 %v939, %v937
    %v996 = vpack.c.b16 %v942, %v940
    %v997 = vpack.c.b16 %v943, %v941
    %v998 = vpack.c.b16 %v946, %v944
    %v999 = vpack.c.b16 %v947, %v945
    %v1000 = vpack.c.b16 %v950, %v948
    %v1001 = vpack.c.b16 %v951, %v949
    %v1002 = vpack.c.b16 %v954, %v952
    %v1003 = vpack.c.b16 %v955, %v953
    %v1004 = vpack.c.b16 %v958, %v956
    %v1005 = vpack.c.b16 %v959, %v957
    %v1006 = vpack.c.b16 %v962, %v960
    %v1007 = vpack.c.b16 %v963, %v961
    %v1008 = vpack.c.b16 %v966, %v964
    %v1009 = vpack.c.b16 %v967, %v965
    %v1010 = vpack.c.b16 %v970, %v968
    %v1011 = vpack.c.b16 %v971, %v969
    %v1012 = vpack.c.b16 %v974, %v972
    %v1013 = vpack.c.b16 %v975, %v973
    %v1014 = vpack.c.b16 %v978, %v976
    %v1015 = vpack.c.b16 %v979, %v977
    %v1016 = vpack.c.b16 %v982, %v980
    %v1017 = vpack.c.b16 %v983, %v981
    %v1018 = vpack.c.b16 %v986, %v984
    %v1019 = vpack.c.b16 %v987, %v985
    %1052 = vmatprep.subr.bf16.mxu0 %v989
    %1053 = vmatpush1.bf16.msra.mxu0 %v988
    %1054 = vmatprep.subr.bf16.mxu0 %v991
    %1055 = vmatpush1.bf16.msra.mxu0 %v990
    %1056 = vmatprep.subr.bf16.mxu0 %v993
    %1057 = vmatpush1.bf16.msra.mxu0 %v992
    %1058 = vmatprep.subr.bf16.mxu0 %v995
    %1059 = vmatpush1.bf16.msra.mxu0 %v994
    %1060 = vmatprep.subr.bf16.mxu0 %v997
    %1061 = vmatpush1.bf16.msra.mxu0 %v996
    %1062 = vmatprep.subr.bf16.mxu0 %v999
    %1063 = vmatpush1.bf16.msra.mxu0 %v998
    %1064 = vmatprep.subr.bf16.mxu0 %v1001
    %1065 = vmatpush1.bf16.msra.mxu0 %v1000
    %1066 = vmatprep.subr.bf16.mxu0 %v1003
    %1067 = vmatpush1.bf16.msra.mxu0 %v1002
    %1068 = vmatprep.subr.bf16.mxu0 %v1005
    %1069 = vmatpush1.bf16.msra.mxu0 %v1004
    %1070 = vmatprep.subr.bf16.mxu0 %v1007
    %1071 = vmatpush1.bf16.msra.mxu0 %v1006
    %1072 = vmatprep.subr.bf16.mxu0 %v1009
    %1073 = vmatpush1.bf16.msra.mxu0 %v1008
    %1074 = vmatprep.subr.bf16.mxu0 %v1011
    %1075 = vmatpush1.bf16.msra.mxu0 %v1010
    %1076 = vmatprep.subr.bf16.mxu0 %v1013
    %1077 = vmatpush1.bf16.msra.mxu0 %v1012
    %1078 = vmatprep.subr.bf16.mxu0 %v1015
    %1079 = vmatpush1.bf16.msra.mxu0 %v1014
    %1080 = vmatprep.subr.bf16.mxu0 %v1017
    %1081 = vmatpush1.bf16.msra.mxu0 %v1016
    %1082 = vmatprep.subr.bf16.mxu0 %v1019
    %1083 = vmatpush1.bf16.msra.mxu0 %v1018
    %1084 = vmatprep.mubr.bf16.mxu0 %v813
    %1085 = vmatmul.mubr.bf16.gmra.mrb[0].mxu0 %v812
    %v1086 = vpop.f32.mrb[0].mxu0
    %v1087 = vadd.f32 0.0, %v1086
    %v1088 = vpop.f32.mrb[0].mxu0
    %v1089 = vadd.f32 0.0, %v1088
    %v1090 = vpop.f32.mrb[0].mxu0
    %v1091 = vadd.f32 0.0, %v1090
    %v1092 = vpop.f32.mrb[0].mxu0
    %v1093 = vadd.f32 0.0, %v1092
    %1094 = vmatprep.mubr.bf16.mxu0 %v815
    %1095 = vmatmul.mubr.bf16.gmra.mrb[0].mxu0 %v814
    %v1096 = vpop.f32.mrb[0].mxu0
    %v1097 = vadd.f32 0.0, %v1096
    %v1098 = vpop.f32.mrb[0].mxu0
    %v1099 = vadd.f32 0.0, %v1098
    %v1100 = vpop.f32.mrb[0].mxu0
    %v1101 = vadd.f32 0.0, %v1100
    %v1102 = vpop.f32.mrb[0].mxu0
    %v1103 = vadd.f32 0.0, %v1102
    %1104 = vmatprep.mubr.bf16.mxu0 %v817
    %1105 = vmatmul.mubr.bf16.gmra.mrb[0].mxu0 %v816
    %v1106 = vpop.f32.mrb[0].mxu0
    %v1107 = vadd.f32 0.0, %v1106
    %v1108 = vpop.f32.mrb[0].mxu0
    %v1109 = vadd.f32 0.0, %v1108
    %v1110 = vpop.f32.mrb[0].mxu0
    %v1111 = vadd.f32 0.0, %v1110
    %v1112 = vpop.f32.mrb[0].mxu0
    %v1113 = vadd.f32 0.0, %v1112
    %1114 = vmatprep.mubr.bf16.mxu0 %v819
    %1115 = vmatmul.mubr.bf16.gmra.mrb[0].mxu0 %v818
    %v1116 = vpop.f32.mrb[0].mxu0
    %v1117 = vadd.f32 0.0, %v1116
    %v1118 = vpop.f32.mrb[0].mxu0
    %v1119 = vadd.f32 0.0, %v1118
    %v1120 = vpop.f32.mrb[0].mxu0
    %v1121 = vadd.f32 0.0, %v1120
    %v1122 = vpop.f32.mrb[0].mxu0
    %v1123 = vadd.f32 0.0, %v1122
    %1124 = vmatprep.mubr.bf16.mxu0 %v821
    %1125 = vmatmul.mubr.bf16.gmra.mrb[0].mxu0 %v820
    %v1126 = vpop.f32.mrb[0].mxu0
    %v1127 = vadd.f32 0.0, %v1126
    %v1128 = vpop.f32.mrb[0].mxu0
    %v1129 = vadd.f32 0.0, %v1128
    %v1130 = vpop.f32.mrb[0].mxu0
    %v1131 = vadd.f32 0.0, %v1130
    %v1132 = vpop.f32.mrb[0].mxu0
    %v1133 = vadd.f32 0.0, %v1132
    %1134 = vmatprep.mubr.bf16.mxu0 %v823
    %1135 = vmatmul.mubr.bf16.gmra.mrb[0].mxu0 %v822
    %v1136 = vpop.f32.mrb[0].mxu0
    %v1137 = vadd.f32 0.0, %v1136
    %v1138 = vpop.f32.mrb[0].mxu0
    %v1139 = vadd.f32 0.0, %v1138
    %v1140 = vpop.f32.mrb[0].mxu0
    %v1141 = vadd.f32 0.0, %v1140
    %v1142 = vpop.f32.mrb[0].mxu0
    %v1143 = vadd.f32 0.0, %v1142
    %1144 = vmatprep.mubr.bf16.mxu0 %v825
    %1145 = vmatmul.mubr.bf16.gmra.mrb[0].mxu0 %v824
    %v1146 = vpop.f32.mrb[0].mxu0
    %v1147 = vadd.f32 0.0, %v1146
    %v1148 = vpop.f32.mrb[0].mxu0
    %v1149 = vadd.f32 0.0, %v1148
    %v1150 = vpop.f32.mrb[0].mxu0
    %v1151 = vadd.f32 0.0, %v1150
    %v1152 = vpop.f32.mrb[0].mxu0
    %v1153 = vadd.f32 0.0, %v1152
    %1154 = vmatprep.mubr.bf16.mxu0 %v827
    %1155 = vmatmul.mubr.bf16.gmra.mrb[0].mxu0 %v826
    %v1156 = vpop.f32.mrb[0].mxu0
    %v1157 = vadd.f32 0.0, %v1156
    %v1158 = vpop.f32.mrb[0].mxu0
    %v1159 = vadd.f32 0.0, %v1158
    %v1160 = vpop.f32.mrb[0].mxu0
    %v1161 = vadd.f32 0.0, %v1160
    %v1162 = vpop.f32.mrb[0].mxu0
    %v1163 = vadd.f32 0.0, %v1162
    %1164 = vmatprep.mubr.bf16.mxu0 %v829
    %1165 = vmatmul.mubr.bf16.gmra.mrb[0].mxu0 %v828
    %v1166 = vpop.f32.mrb[0].mxu0
    %v1167 = vadd.f32 0.0, %v1166
    %v1168 = vpop.f32.mrb[0].mxu0
    %v1169 = vadd.f32 0.0, %v1168
    %v1170 = vpop.f32.mrb[0].mxu0
    %v1171 = vadd.f32 0.0, %v1170
    %v1172 = vpop.f32.mrb[0].mxu0
    %v1173 = vadd.f32 0.0, %v1172
    %1174 = vmatprep.mubr.bf16.mxu0 %v831
    %1175 = vmatmul.mubr.bf16.gmra.mrb[0].mxu0 %v830
    %v1176 = vpop.f32.mrb[0].mxu0
    %v1177 = vadd.f32 0.0, %v1176
    %v1178 = vpop.f32.mrb[0].mxu0
    %v1179 = vadd.f32 0.0, %v1178
    %v1180 = vpop.f32.mrb[0].mxu0
    %v1181 = vadd.f32 0.0, %v1180
    %v1182 = vpop.f32.mrb[0].mxu0
    %v1183 = vadd.f32 0.0, %v1182
    %1184 = vmatprep.mubr.bf16.mxu0 %v833
    %1185 = vmatmul.mubr.bf16.gmra.mrb[0].mxu0 %v832
    %v1186 = vpop.f32.mrb[0].mxu0
    %v1187 = vadd.f32 0.0, %v1186
    %v1188 = vpop.f32.mrb[0].mxu0
    %v1189 = vadd.f32 0.0, %v1188
    %v1190 = vpop.f32.mrb[0].mxu0
    %v1191 = vadd.f32 0.0, %v1190
    %v1192 = vpop.f32.mrb[0].mxu0
    %v1193 = vadd.f32 0.0, %v1192
    %1194 = vmatprep.mubr.bf16.mxu0 %v835
    %1195 = vmatmul.mubr.bf16.gmra.mrb[0].mxu0 %v834
    %v1196 = vpop.f32.mrb[0].mxu0
    %v1197 = vadd.f32 0.0, %v1196
    %v1198 = vpop.f32.mrb[0].mxu0
    %v1199 = vadd.f32 0.0, %v1198
    %v1200 = vpop.f32.mrb[0].mxu0
    %v1201 = vadd.f32 0.0, %v1200
    %v1202 = vpop.f32.mrb[0].mxu0
    %v1203 = vadd.f32 0.0, %v1202
    %1204 = vmatprep.mubr.bf16.mxu0 %v837
    %1205 = vmatmul.mubr.bf16.gmra.mrb[0].mxu0 %v836
    %v1206 = vpop.f32.mrb[0].mxu0
    %v1207 = vadd.f32 0.0, %v1206
    %v1208 = vpop.f32.mrb[0].mxu0
    %v1209 = vadd.f32 0.0, %v1208
    %v1210 = vpop.f32.mrb[0].mxu0
    %v1211 = vadd.f32 0.0, %v1210
    %v1212 = vpop.f32.mrb[0].mxu0
    %v1213 = vadd.f32 0.0, %v1212
    %1214 = vmatprep.mubr.bf16.mxu0 %v839
    %1215 = vmatmul.mubr.bf16.gmra.mrb[0].mxu0 %v838
    %v1216 = vpop.f32.mrb[0].mxu0
    %v1217 = vadd.f32 0.0, %v1216
    %v1218 = vpop.f32.mrb[0].mxu0
    %v1219 = vadd.f32 0.0, %v1218
    %v1220 = vpop.f32.mrb[0].mxu0
    %v1221 = vadd.f32 0.0, %v1220
    %v1222 = vpop.f32.mrb[0].mxu0
    %v1223 = vadd.f32 0.0, %v1222
    %1224 = vmatprep.mubr.bf16.mxu0 %v841
    %1225 = vmatmul.mubr.bf16.gmra.mrb[0].mxu0 %v840
    %v1226 = vpop.f32.mrb[0].mxu0
    %v1227 = vadd.f32 0.0, %v1226
    %v1228 = vpop.f32.mrb[0].mxu0
    %v1229 = vadd.f32 0.0, %v1228
    %v1230 = vpop.f32.mrb[0].mxu0
    %v1231 = vadd.f32 0.0, %v1230
    %v1232 = vpop.f32.mrb[0].mxu0
    %v1233 = vadd.f32 0.0, %v1232
    %1234 = vmatprep.mubr.bf16.mxu0 %v843
    %1235 = vmatmul.mubr.bf16.gmra.mrb[0].mxu0 %v842
    %v1236 = vpop.f32.mrb[0].mxu0
    %v1237 = vadd.f32 0.0, %v1236
    %v1238 = vpop.f32.mrb[0].mxu0
    %v1239 = vadd.f32 0.0, %v1238
    %v1240 = vpop.f32.mrb[0].mxu0
    %v1241 = vadd.f32 0.0, %v1240
    %v1242 = vpop.f32.mrb[0].mxu0
    %v1243 = vadd.f32 0.0, %v1242
    %1244 = vmatprep.mubr.bf16.mxu0 %v845
    %1245 = vmatmul.mubr.bf16.gmra.mrb[0].mxu0 %v844
    %v1246 = vpop.f32.mrb[0].mxu0
    %v1247 = vadd.f32 0.0, %v1246
    %v1248 = vpop.f32.mrb[0].mxu0
    %v1249 = vadd.f32 0.0, %v1248
    %v1250 = vpop.f32.mrb[0].mxu0
    %v1251 = vadd.f32 0.0, %v1250
    %v1252 = vpop.f32.mrb[0].mxu0
    %v1253 = vadd.f32 0.0, %v1252
    %1254 = vmatprep.mubr.bf16.mxu0 %v847
    %1255 = vmatmul.mubr.bf16.gmra.mrb[0].mxu0 %v846
    %v1256 = vpop.f32.mrb[0].mxu0
    %v1257 = vadd.f32 0.0, %v1256
    %v1258 = vpop.f32.mrb[0].mxu0
    %v1259 = vadd.f32 0.0, %v1258
    %v1260 = vpop.f32.mrb[0].mxu0
    %v1261 = vadd.f32 0.0, %v1260
    %v1262 = vpop.f32.mrb[0].mxu0
    %v1263 = vadd.f32 0.0, %v1262
    %1264 = vmatprep.mubr.bf16.mxu0 %v849
    %1265 = vmatmul.mubr.bf16.gmra.mrb[0].mxu0 %v848
    %v1266 = vpop.f32.mrb[0].mxu0
    %v1267 = vadd.f32 0.0, %v1266
    %v1268 = vpop.f32.mrb[0].mxu0
    %v1269 = vadd.f32 0.0, %v1268
    %v1270 = vpop.f32.mrb[0].mxu0
    %v1271 = vadd.f32 0.0, %v1270
    %v1272 = vpop.f32.mrb[0].mxu0
    %v1273 = vadd.f32 0.0, %v1272
    %1274 = vmatprep.mubr.bf16.mxu0 %v851
    %1275 = vmatmul.mubr.bf16.gmra.mrb[0].mxu0 %v850
    %v1276 = vpop.f32.mrb[0].mxu0
    %v1277 = vadd.f32 0.0, %v1276
    %v1278 = vpop.f32.mrb[0].mxu0
    %v1279 = vadd.f32 0.0, %v1278
    %v1280 = vpop.f32.mrb[0].mxu0
    %v1281 = vadd.f32 0.0, %v1280
    %v1282 = vpop.f32.mrb[0].mxu0
    %v1283 = vadd.f32 0.0, %v1282
    %1284 = vmatprep.mubr.bf16.mxu0 %v853
    %1285 = vmatmul.mubr.bf16.gmra.mrb[0].mxu0 %v852
    %v1286 = vpop.f32.mrb[0].mxu0
    %v1287 = vadd.f32 0.0, %v1286
    %v1288 = vpop.f32.mrb[0].mxu0
    %v1289 = vadd.f32 0.0, %v1288
    %v1290 = vpop.f32.mrb[0].mxu0
    %v1291 = vadd.f32 0.0, %v1290
    %v1292 = vpop.f32.mrb[0].mxu0
    %v1293 = vadd.f32 0.0, %v1292
    %1294 = vmatprep.mubr.bf16.mxu0 %v855
    %1295 = vmatmul.mubr.bf16.gmra.mrb[0].mxu0 %v854
    %v1296 = vpop.f32.mrb[0].mxu0
    %v1297 = vadd.f32 0.0, %v1296
    %v1298 = vpop.f32.mrb[0].mxu0
    %v1299 = vadd.f32 0.0, %v1298
    %v1300 = vpop.f32.mrb[0].mxu0
    %v1301 = vadd.f32 0.0, %v1300
    %v1302 = vpop.f32.mrb[0].mxu0
    %v1303 = vadd.f32 0.0, %v1302
    %1304 = vmatprep.mubr.bf16.mxu0 %v857
    %1305 = vmatmul.mubr.bf16.gmra.mrb[0].mxu0 %v856
    %v1306 = vpop.f32.mrb[0].mxu0
    %v1307 = vadd.f32 0.0, %v1306
    %v1308 = vpop.f32.mrb[0].mxu0
    %v1309 = vadd.f32 0.0, %v1308
    %v1310 = vpop.f32.mrb[0].mxu0
    %v1311 = vadd.f32 0.0, %v1310
    %v1312 = vpop.f32.mrb[0].mxu0
    %v1313 = vadd.f32 0.0, %v1312
    %1314 = vmatprep.mubr.bf16.mxu0 %v859
    %1315 = vmatmul.mubr.bf16.gmra.mrb[0].mxu0 %v858
    %v1316 = vpop.f32.mrb[0].mxu0
    %v1317 = vadd.f32 0.0, %v1316
    %v1318 = vpop.f32.mrb[0].mxu0
    %v1319 = vadd.f32 0.0, %v1318
    %v1320 = vpop.f32.mrb[0].mxu0
    %v1321 = vadd.f32 0.0, %v1320
    %v1322 = vpop.f32.mrb[0].mxu0
    %v1323 = vadd.f32 0.0, %v1322
    %1324 = vdwg.mxu0
    %v1325 = vmul.f32 %v764, %v1087
    %v1326 = vmul.f32 %v764, %v1089
    %v1327 = vmul.f32 %v765, %v1091
    %v1328 = vmul.f32 %v765, %v1093
    %v1329 = vmul.f32 %v766, %v1097
    %v1330 = vmul.f32 %v766, %v1099
    %v1331 = vmul.f32 %v767, %v1101
    %v1332 = vmul.f32 %v767, %v1103
    %v1333 = vmul.f32 %v768, %v1107
    %v1334 = vmul.f32 %v768, %v1109
    %v1335 = vmul.f32 %v769, %v1111
    %v1336 = vmul.f32 %v769, %v1113
    %v1337 = vmul.f32 %v770, %v1117
    %v1338 = vmul.f32 %v770, %v1119
    %v1339 = vmul.f32 %v771, %v1121
    %v1340 = vmul.f32 %v771, %v1123
    %v1341 = vmul.f32 %v772, %v1127
    %v1342 = vmul.f32 %v772, %v1129
    %v1343 = vmul.f32 %v773, %v1131
    %v1344 = vmul.f32 %v773, %v1133
    %v1345 = vmul.f32 %v774, %v1137
    %v1346 = vmul.f32 %v774, %v1139
    %v1347 = vmul.f32 %v775, %v1141
    %v1348 = vmul.f32 %v775, %v1143
    %v1349 = vmul.f32 %v776, %v1147
    %v1350 = vmul.f32 %v776, %v1149
    %v1351 = vmul.f32 %v777, %v1151
    %v1352 = vmul.f32 %v777, %v1153
    %v1353 = vmul.f32 %v778, %v1157
    %v1354 = vmul.f32 %v778, %v1159
    %v1355 = vmul.f32 %v779, %v1161
    %v1356 = vmul.f32 %v779, %v1163
    %v1357 = vmul.f32 %v780, %v1167
    %v1358 = vmul.f32 %v780, %v1169
    %v1359 = vmul.f32 %v781, %v1171
    %v1360 = vmul.f32 %v781, %v1173
    %v1361 = vmul.f32 %v782, %v1177
    %v1362 = vmul.f32 %v782, %v1179
    %v1363 = vmul.f32 %v783, %v1181
    %v1364 = vmul.f32 %v783, %v1183
    %v1365 = vmul.f32 %v784, %v1187
    %v1366 = vmul.f32 %v784, %v1189
    %v1367 = vmul.f32 %v785, %v1191
    %v1368 = vmul.f32 %v785, %v1193
    %v1369 = vmul.f32 %v786, %v1197
    %v1370 = vmul.f32 %v786, %v1199
    %v1371 = vmul.f32 %v787, %v1201
    %v1372 = vmul.f32 %v787, %v1203
    %v1373 = vmul.f32 %v788, %v1207
    %v1374 = vmul.f32 %v788, %v1209
    %v1375 = vmul.f32 %v789, %v1211
    %v1376 = vmul.f32 %v789, %v1213
    %v1377 = vmul.f32 %v790, %v1217
    %v1378 = vmul.f32 %v790, %v1219
    %v1379 = vmul.f32 %v791, %v1221
    %v1380 = vmul.f32 %v791, %v1223
    %v1381 = vmul.f32 %v792, %v1227
    %v1382 = vmul.f32 %v792, %v1229
    %v1383 = vmul.f32 %v793, %v1231
    %v1384 = vmul.f32 %v793, %v1233
    %v1385 = vmul.f32 %v794, %v1237
    %v1386 = vmul.f32 %v794, %v1239
    %v1387 = vmul.f32 %v795, %v1241
    %v1388 = vmul.f32 %v795, %v1243
    %v1389 = vmul.f32 %v796, %v1247
    %v1390 = vmul.f32 %v796, %v1249
    %v1391 = vmul.f32 %v797, %v1251
    %v1392 = vmul.f32 %v797, %v1253
    %v1393 = vmul.f32 %v798, %v1257
    %v1394 = vmul.f32 %v798, %v1259
    %v1395 = vmul.f32 %v799, %v1261
    %v1396 = vmul.f32 %v799, %v1263
    %v1397 = vmul.f32 %v800, %v1267
    %v1398 = vmul.f32 %v800, %v1269
    %v1399 = vmul.f32 %v801, %v1271
    %v1400 = vmul.f32 %v801, %v1273
    %v1401 = vmul.f32 %v802, %v1277
    %v1402 = vmul.f32 %v802, %v1279
    %v1403 = vmul.f32 %v803, %v1281
    %v1404 = vmul.f32 %v803, %v1283
    %v1405 = vmul.f32 %v804, %v1287
    %v1406 = vmul.f32 %v804, %v1289
    %v1407 = vmul.f32 %v805, %v1291
    %v1408 = vmul.f32 %v805, %v1293
    %v1409 = vmul.f32 %v806, %v1297
    %v1410 = vmul.f32 %v806, %v1299
    %v1411 = vmul.f32 %v807, %v1301
    %v1412 = vmul.f32 %v807, %v1303
    %v1413 = vmul.f32 %v808, %v1307
    %v1414 = vmul.f32 %v808, %v1309
    %v1415 = vmul.f32 %v809, %v1311
    %v1416 = vmul.f32 %v809, %v1313
    %v1417 = vmul.f32 %v810, %v1317
    %v1418 = vmul.f32 %v810, %v1319
    %v1419 = vmul.f32 %v811, %v1321
    %v1420 = vmul.f32 %v811, %v1323
    %v1421 = vld [vmem:[%s2] sm:$0x3]
    %v1423 = vlaneseq
    %v1424 = vshrl.u32 %v1423, 7
    %v1425 = vsub.s32 0, %v1424
    %v1426 = vrot.slane %v1421, %v1425
    %v1427 = vlaneseq
    %v1428 = vshrl.u32 %v1427, 7
    %v1429 = vsub.s32 1, %v1428
    %v1430 = vrot.slane %v1421, %v1429
    %v1433 = vadd.f32 %v1325, %v1426
    %v1434 = vadd.f32 %v1326, %v1430
    %v1435 = vadd.f32 %v1327, %v1426
    %v1436 = vadd.f32 %v1328, %v1430
    %v1437 = vadd.f32 %v1329, %v1426
    %v1438 = vadd.f32 %v1330, %v1430
    %v1439 = vadd.f32 %v1331, %v1426
    %v1440 = vadd.f32 %v1332, %v1430
    %v1441 = vadd.f32 %v1333, %v1426
    %v1442 = vadd.f32 %v1334, %v1430
    %v1443 = vadd.f32 %v1335, %v1426
    %v1444 = vadd.f32 %v1336, %v1430
    %v1445 = vadd.f32 %v1337, %v1426
    %v1446 = vadd.f32 %v1338, %v1430
    %v1447 = vadd.f32 %v1339, %v1426
    %v1448 = vadd.f32 %v1340, %v1430
    %v1449 = vadd.f32 %v1341, %v1426
    %v1450 = vadd.f32 %v1342, %v1430
    %v1451 = vadd.f32 %v1343, %v1426
    %v1452 = vadd.f32 %v1344, %v1430
    %v1453 = vadd.f32 %v1345, %v1426
    %v1454 = vadd.f32 %v1346, %v1430
    %v1455 = vadd.f32 %v1347, %v1426
    %v1456 = vadd.f32 %v1348, %v1430
    %v1457 = vadd.f32 %v1349, %v1426
    %v1458 = vadd.f32 %v1350, %v1430
    %v1459 = vadd.f32 %v1351, %v1426
    %v1460 = vadd.f32 %v1352, %v1430
    %v1461 = vadd.f32 %v1353, %v1426
    %v1462 = vadd.f32 %v1354, %v1430
    %v1463 = vadd.f32 %v1355, %v1426
    %v1464 = vadd.f32 %v1356, %v1430
    %v1465 = vadd.f32 %v1357, %v1426
    %v1466 = vadd.f32 %v1358, %v1430
    %v1467 = vadd.f32 %v1359, %v1426
    %v1468 = vadd.f32 %v1360, %v1430
    %v1469 = vadd.f32 %v1361, %v1426
    %v1470 = vadd.f32 %v1362, %v1430
    %v1471 = vadd.f32 %v1363, %v1426
    %v1472 = vadd.f32 %v1364, %v1430
    %v1473 = vadd.f32 %v1365, %v1426
    %v1474 = vadd.f32 %v1366, %v1430
    %v1475 = vadd.f32 %v1367, %v1426
    %v1476 = vadd.f32 %v1368, %v1430
    %v1477 = vadd.f32 %v1369, %v1426
    %v1478 = vadd.f32 %v1370, %v1430
    %v1479 = vadd.f32 %v1371, %v1426
    %v1480 = vadd.f32 %v1372, %v1430
    %v1481 = vadd.f32 %v1373, %v1426
    %v1482 = vadd.f32 %v1374, %v1430
    %v1483 = vadd.f32 %v1375, %v1426
    %v1484 = vadd.f32 %v1376, %v1430
    %v1485 = vadd.f32 %v1377, %v1426
    %v1486 = vadd.f32 %v1378, %v1430
    %v1487 = vadd.f32 %v1379, %v1426
    %v1488 = vadd.f32 %v1380, %v1430
    %v1489 = vadd.f32 %v1381, %v1426
    %v1490 = vadd.f32 %v1382, %v1430
    %v1491 = vadd.f32 %v1383, %v1426
    %v1492 = vadd.f32 %v1384, %v1430
    %v1493 = vadd.f32 %v1385, %v1426
    %v1494 = vadd.f32 %v1386, %v1430
    %v1495 = vadd.f32 %v1387, %v1426
    %v1496 = vadd.f32 %v1388, %v1430
    %v1497 = vadd.f32 %v1389, %v1426
    %v1498 = vadd.f32 %v1390, %v1430
    %v1499 = vadd.f32 %v1391, %v1426
    %v1500 = vadd.f32 %v1392, %v1430
    %v1501 = vadd.f32 %v1393, %v1426
    %v1502 = vadd.f32 %v1394, %v1430
    %v1503 = vadd.f32 %v1395, %v1426
    %v1504 = vadd.f32 %v1396, %v1430
    %v1505 = vadd.f32 %v1397, %v1426
    %v1506 = vadd.f32 %v1398, %v1430
    %v1507 = vadd.f32 %v1399, %v1426
    %v1508 = vadd.f32 %v1400, %v1430
    %v1509 = vadd.f32 %v1401, %v1426
    %v1510 = vadd.f32 %v1402, %v1430
    %v1511 = vadd.f32 %v1403, %v1426
    %v1512 = vadd.f32 %v1404, %v1430
    %v1513 = vadd.f32 %v1405, %v1426
    %v1514 = vadd.f32 %v1406, %v1430
    %v1515 = vadd.f32 %v1407, %v1426
    %v1516 = vadd.f32 %v1408, %v1430
    %v1517 = vadd.f32 %v1409, %v1426
    %v1518 = vadd.f32 %v1410, %v1430
    %v1519 = vadd.f32 %v1411, %v1426
    %v1520 = vadd.f32 %v1412, %v1430
    %v1521 = vadd.f32 %v1413, %v1426
    %v1522 = vadd.f32 %v1414, %v1430
    %v1523 = vadd.f32 %v1415, %v1426
    %v1524 = vadd.f32 %v1416, %v1430
    %v1525 = vadd.f32 %v1417, %v1426
    %v1526 = vadd.f32 %v1418, %v1430
    %v1527 = vadd.f32 %v1419, %v1426
    %v1528 = vadd.f32 %v1420, %v1430
    %1529 = vst [vmem:[#allocation7] sm:$0xff] %v1433
    %1530 = vst [vmem:[#allocation7 + $0x8] sm:$0xff] %v1434
    %1531 = vst [vmem:[#allocation7 + $0x10] sm:$0xff] %v1435
    %1532 = vst [vmem:[#allocation7 + $0x18] sm:$0xff] %v1436
    %1533 = vst [vmem:[#allocation7 + $0x20] sm:$0xff] %v1437
    %1534 = vst [vmem:[#allocation7 + $0x28] sm:$0xff] %v1438
    %1535 = vst [vmem:[#allocation7 + $0x30] sm:$0xff] %v1439
    %1536 = vst [vmem:[#allocation7 + $0x38] sm:$0xff] %v1440
    %1537 = vst [vmem:[#allocation7 + $0x40] sm:$0xff] %v1441
    %1538 = vst [vmem:[#allocation7 + $0x48] sm:$0xff] %v1442
    %1539 = vst [vmem:[#allocation7 + $0x50] sm:$0xff] %v1443
    %1540 = vst [vmem:[#allocation7 + $0x58] sm:$0xff] %v1444
    %1541 = vst [vmem:[#allocation7 + $0x60] sm:$0xff] %v1445
    %1542 = vst [vmem:[#allocation7 + $0x68] sm:$0xff] %v1446
    %1543 = vst [vmem:[#allocation7 + $0x70] sm:$0xff] %v1447
    %1544 = vst [vmem:[#allocation7 + $0x78] sm:$0xff] %v1448
    %1545 = vst [vmem:[#allocation7 + $0x80] sm:$0xff] %v1449
    %1546 = vst [vmem:[#allocation7 + $0x88] sm:$0xff] %v1450
    %1547 = vst [vmem:[#allocation7 + $0x90] sm:$0xff] %v1451
    %1548 = vst [vmem:[#allocation7 + $0x98] sm:$0xff] %v1452
    %1549 = vst [vmem:[#allocation7 + $0xa0] sm:$0xff] %v1453
    %1550 = vst [vmem:[#allocation7 + $0xa8] sm:$0xff] %v1454
    %1551 = vst [vmem:[#allocation7 + $0xb0] sm:$0xff] %v1455
    %1552 = vst [vmem:[#allocation7 + $0xb8] sm:$0xff] %v1456
    %1553 = vst [vmem:[#allocation7 + $0xc0] sm:$0xff] %v1457
    %1554 = vst [vmem:[#allocation7 + $0xc8] sm:$0xff] %v1458
    %1555 = vst [vmem:[#allocation7 + $0xd0] sm:$0xff] %v1459
    %1556 = vst [vmem:[#allocation7 + $0xd8] sm:$0xff] %v1460
    %1557 = vst [vmem:[#allocation7 + $0xe0] sm:$0xff] %v1461
    %1558 = vst [vmem:[#allocation7 + $0xe8] sm:$0xff] %v1462
    %1559 = vst [vmem:[#allocation7 + $0xf0] sm:$0xff] %v1463
    %1560 = vst [vmem:[#allocation7 + $0xf8] sm:$0xff] %v1464
    %1561 = vst [vmem:[#allocation7 + $0x100] sm:$0xff] %v1465
    %1562 = vst [vmem:[#allocation7 + $0x108] sm:$0xff] %v1466
    %1563 = vst [vmem:[#allocation7 + $0x110] sm:$0xff] %v1467
    %1564 = vst [vmem:[#allocation7 + $0x118] sm:$0xff] %v1468
    %1565 = vst [vmem:[#allocation7 + $0x120] sm:$0xff] %v1469
    %1566 = vst [vmem:[#allocation7 + $0x128] sm:$0xff] %v1470
    %1567 = vst [vmem:[#allocation7 + $0x130] sm:$0xff] %v1471
    %1568 = vst [vmem:[#allocation7 + $0x138] sm:$0xff] %v1472
    %1569 = vst [vmem:[#allocation7 + $0x140] sm:$0xff] %v1473
    %1570 = vst [vmem:[#allocation7 + $0x148] sm:$0xff] %v1474
    %1571 = vst [vmem:[#allocation7 + $0x150] sm:$0xff] %v1475
    %1572 = vst [vmem:[#allocation7 + $0x158] sm:$0xff] %v1476
    %1573 = vst [vmem:[#allocation7 + $0x160] sm:$0xff] %v1477
    %1574 = vst [vmem:[#allocation7 + $0x168] sm:$0xff] %v1478
    %1575 = vst [vmem:[#allocation7 + $0x170] sm:$0xff] %v1479
    %1576 = vst [vmem:[#allocation7 + $0x178] sm:$0xff] %v1480
    %1577 = vst [vmem:[#allocation7 + $0x180] sm:$0xff] %v1481
    %1578 = vst [vmem:[#allocation7 + $0x188] sm:$0xff] %v1482
    %1579 = vst [vmem:[#allocation7 + $0x190] sm:$0xff] %v1483
    %1580 = vst [vmem:[#allocation7 + $0x198] sm:$0xff] %v1484
    %1581 = vst [vmem:[#allocation7 + $0x1a0] sm:$0xff] %v1485
    %1582 = vst [vmem:[#allocation7 + $0x1a8] sm:$0xff] %v1486
    %1583 = vst [vmem:[#allocation7 + $0x1b0] sm:$0xff] %v1487
    %1584 = vst [vmem:[#allocation7 + $0x1b8] sm:$0xff] %v1488
    %1585 = vst [vmem:[#allocation7 + $0x1c0] sm:$0xff] %v1489
    %1586 = vst [vmem:[#allocation7 + $0x1c8] sm:$0xff] %v1490
    %1587 = vst [vmem:[#allocation7 + $0x1d0] sm:$0xff] %v1491
    %1588 = vst [vmem:[#allocation7 + $0x1d8] sm:$0xff] %v1492
    %1589 = vst [vmem:[#allocation7 + $0x1e0] sm:$0xff] %v1493
    %1590 = vst [vmem:[#allocation7 + $0x1e8] sm:$0xff] %v1494
    %1591 = vst [vmem:[#allocation7 + $0x1f0] sm:$0xff] %v1495
    %1592 = vst [vmem:[#allocation7 + $0x1f8] sm:$0xff] %v1496
    %1593 = vst [vmem:[#allocation7 + $0x200] sm:$0xff] %v1497
    %1594 = vst [vmem:[#allocation7 + $0x208] sm:$0xff] %v1498
    %1595 = vst [vmem:[#allocation7 + $0x210] sm:$0xff] %v1499
    %1596 = vst [vmem:[#allocation7 + $0x218] sm:$0xff] %v1500
    %1597 = vst [vmem:[#allocation7 + $0x220] sm:$0xff] %v1501
    %1598 = vst [vmem:[#allocation7 + $0x228] sm:$0xff] %v1502
    %1599 = vst [vmem:[#allocation7 + $0x230] sm:$0xff] %v1503
    %1600 = vst [vmem:[#allocation7 + $0x238] sm:$0xff] %v1504
    %1601 = vst [vmem:[#allocation7 + $0x240] sm:$0xff] %v1505
    %1602 = vst [vmem:[#allocation7 + $0x248] sm:$0xff] %v1506
    %1603 = vst [vmem:[#allocation7 + $0x250] sm:$0xff] %v1507
    %1604 = vst [vmem:[#allocation7 + $0x258] sm:$0xff] %v1508
    %1605 = vst [vmem:[#allocation7 + $0x260] sm:$0xff] %v1509
    %1606 = vst [vmem:[#allocation7 + $0x268] sm:$0xff] %v1510
    %1607 = vst [vmem:[#allocation7 + $0x270] sm:$0xff] %v1511
    %1608 = vst [vmem:[#allocation7 + $0x278] sm:$0xff] %v1512
    %1609 = vst [vmem:[#allocation7 + $0x280] sm:$0xff] %v1513
    %1610 = vst [vmem:[#allocation7 + $0x288] sm:$0xff] %v1514
    %1611 = vst [vmem:[#allocation7 + $0x290] sm:$0xff] %v1515
    %1612 = vst [vmem:[#allocation7 + $0x298] sm:$0xff] %v1516
    %1613 = vst [vmem:[#allocation7 + $0x2a0] sm:$0xff] %v1517
    %1614 = vst [vmem:[#allocation7 + $0x2a8] sm:$0xff] %v1518
    %1615 = vst [vmem:[#allocation7 + $0x2b0] sm:$0xff] %v1519
    %1616 = vst [vmem:[#allocation7 + $0x2b8] sm:$0xff] %v1520
    %1617 = vst [vmem:[#allocation7 + $0x2c0] sm:$0xff] %v1521
    %1618 = vst [vmem:[#allocation7 + $0x2c8] sm:$0xff] %v1522
    %1619 = vst [vmem:[#allocation7 + $0x2d0] sm:$0xff] %v1523
    %1620 = vst [vmem:[#allocation7 + $0x2d8] sm:$0xff] %v1524
    %1621 = vst [vmem:[#allocation7 + $0x2e0] sm:$0xff] %v1525
    %1622 = vst [vmem:[#allocation7 + $0x2e8] sm:$0xff] %v1526
    %1623 = vst [vmem:[#allocation7 + $0x2f0] sm:$0xff] %v1527
    %1624 = vst [vmem:[#allocation7 + $0x2f8] sm:$0xff] %v1528
    // Predicated region
    $region22: #{layernorm_linear_folded.1} parent=1 // pred_check
      _
    $region23: #{layernorm_linear_folded.1} parent=1 // pred_check_branch
      %1626 = sbr.rel (0) target = $region25
    $region24: #{layernorm_linear_folded.1} parent=1 // pred_region
      %s1628 = ssub.s32 12288, 12288
      %1629 = vsyncadd [#allocation4], %s1628
      %s1630 = sshll.u32 [#allocation7], 4
      %s1631 = int_to_ptr.vmem [resolvable:$true] %s1630
      %1636 = dma.vmem_to_hbm [thread:$0]  %s1631, 12288, %s3, [#allocation4], 256, 256, 16
    $region25: #{layernorm_linear_folded.1} parent=1 // pred_fallthru
      _
    // Predicated region
    $region26: #{layernorm_linear_folded.1} parent=1 // pred_check
      _
    $region27: #{layernorm_linear_folded.1} parent=1 // pred_check_branch
      %1638 = sbr.rel (0) target = $region29
    $region28: #{layernorm_linear_folded.1} parent=1 // pred_region
      %1639 = dma.done [#allocation4], 12288
    $region29: #{layernorm_linear_folded.1} parent=1 // pred_fallthru
      _
    %1640 = vsyncpa [#allocation3], 1
    %1641 = vsyncpa [#allocation6], 1
    %1642 = vsyncpa [#allocation4], 1

</llo_original>
